<compile_context>
chip_gen: v7x
topology: tpu7x:2x2x1
jax: 0.10.0
libtpu: 0.0.40
codegen_flags: <defaults>
</compile_context>

<pallas_src>
import math
import numpy as np

import jax
import jax.numpy as jnp
from jax import lax
from jax.experimental import pallas as pl
from jax.experimental.pallas import tpu as pltpu

# ---------------- model hyper-parameters (small, consistent with the module) ----
D_MODEL = 32
D_INNER = 64
N_HEAD = 2
D_K = 16
D_V = 16
LN_EPS = 1e-5
NEG_INF = -1e30


def _round_up(x, m):
    return ((x + m - 1) // m) * m


# ---------------------------- Pallas kernel -------------------------------------
def _make_encoder_kernel(bsz, L):
    """Build the kernel body with static batch size and padded length."""
    inv_temp = 1.0 / math.sqrt(D_K)     # ScaledDotProductAttention temperature = d_k ** 0.5
    q_off, k_off, v_off = 0, N_HEAD * D_K, 2 * N_HEAD * D_K

    def kernel(nobj_ref,                 # (bsz,) int32 in SMEM (scalar prefetch)
               x_ref,                    # (B*L, D) padded/flattened inputs
               wqkv_ref, bqkv_ref,       # (D, 3*H*D_K), (1, 3*H*D_K)
               wo_ref, bo_ref,           # (H*D_V, D), (1, D)
               w1_ref, b1_ref,           # (D, D_INNER), (1, D_INNER)
               w2_ref, b2_ref,           # (D_INNER, D), (1, D)
               ln_ref,                   # (4, D): rows = [g1; be1; g2; be2]
               o_ref,                    # (B*L, D)
               attn_scr,                 # VMEM (B*L, D) f32
               npad_scr):                # VMEM (B*L, 1) f32
        x = x_ref[...]                                             # (B*L, D)

        # ---- fused QKV projection: one MXU push over all rows -------------------
        qkv = jnp.dot(x, wqkv_ref[...],
                      preferred_element_type=jnp.float32) + bqkv_ref[...]

        # ---- per-batch multi-head attention (only non-position-wise part) -------
        for b in range(bsz):                                       # static, tiny
            nb = nobj_ref[b]                                       # SMEM scalar
            r0 = b * L

            # additive key-padding bias + non-pad row mask, built in-kernel
            col_ids = lax.broadcasted_iota(jnp.int32, (L, L), 1)
            bias = jnp.where(col_ids >= nb, NEG_INF, 0.0).astype(jnp.float32)
            row_ids = lax.broadcasted_iota(jnp.int32, (L, 1), 0)
            npad_scr[r0:r0 + L, :] = (row_ids < nb).astype(jnp.float32)

            attn_b = jnp.zeros((L, D_MODEL), jnp.float32)
            for h in range(N_HEAD):                                # static head loop
                qh = qkv[r0:r0 + L, q_off + h * D_K: q_off + (h + 1) * D_K]
                kh = qkv[r0:r0 + L, k_off + h * D_K: k_off + (h + 1) * D_K]
                vh = qkv[r0:r0 + L, v_off + h * D_V: v_off + (h + 1) * D_V]

                s = lax.dot_general(qh, kh, (((1,), (1,)), ((), ())),
                                    preferred_element_type=jnp.float32)    # (L, L)
                s = s * inv_temp + bias
                s = s - jnp.max(s, axis=-1, keepdims=True)
                p = jnp.exp(s)
                p = p * pl.reciprocal(jnp.sum(p, axis=-1, keepdims=True), approx=True)
                pv = jnp.dot(p, vh, preferred_element_type=jnp.float32)    # (L, D_V)
                # per-head chunk of the output projection; accumulate (no lane concat)
                attn_b = attn_b + jnp.dot(pv, wo_ref[h * D_V:(h + 1) * D_V, :],
                                          preferred_element_type=jnp.float32)
            attn_scr[r0:r0 + L, :] = attn_b

        npad = npad_scr[...]                                       # (B*L, 1)
        attn = attn_scr[...] + bo_ref[...]                         # (B*L, D)

        # ---- residual + LayerNorm 1 (flattened over all rows) -------------------
        y = attn + x
        mu = jnp.mean(y, axis=-1, keepdims=True)
        var = jnp.mean((y - mu) ** 2, axis=-1, keepdims=True)
        y = (y - mu) * lax.rsqrt(var + LN_EPS) * ln_ref[0:1, :] + ln_ref[1:2, :]
        y = y * npad                                               # non_pad_mask

        # ---- position-wise FFN (1x1 convs == row-wise linears), flattened -------
        h1 = jnp.maximum(
            jnp.dot(y, w1_ref[...], preferred_element_type=jnp.float32) + b1_ref[...],
            0.0)
        h2 = jnp.dot(h1, w2_ref[...], preferred_element_type=jnp.float32) + b2_ref[...]

        z = h2 + y
        mu2 = jnp.mean(z, axis=-1, keepdims=True)
        var2 = jnp.mean((z - mu2) ** 2, axis=-1, keepdims=True)
        z = (z - mu2) * lax.rsqrt(var2 + LN_EPS) * ln_ref[2:3, :] + ln_ref[3:4, :]
        z = z * npad                                               # non_pad_mask

        o_ref[...] = z.astype(o_ref.dtype)

    return kernel


# ---------------------------- wrapper --------------------------------------------
def self_attention_encoder(input_feats, num_objs, params):
    """input_feats: (sum(num_objs), D_MODEL) float32; num_objs: python list of ints."""
    bsz = len(num_objs)
    D = input_feats.shape[1]
    L = _round_up(max(num_objs), 8)          # sublane-aligned padded length
    BL = bsz * L

    (wq, bq, wk, bk, wv, bv, wo, bo, g1, be1, w1, b1, w2, b2, g2, be2) = params

    # ---- pack the 16 parameters into 9 slabs (fewer DMAs / VMEM windows) --------
    w_qkv = jnp.concatenate([wq, wk, wv], axis=1)           # (D, 3*H*D_K)
    b_qkv = jnp.concatenate([bq, bk, bv], axis=1)           # (1, 3*H*D_K)
    ln_pack = jnp.concatenate([g1, be1, g2, be2], axis=0)   # (4, D)

    # ---- pad_sequence (batch_first=True) into a flat (B*L, D) buffer ------------
    flat_idx = np.concatenate(
        [b * L + np.arange(n) for b, n in enumerate(num_objs)]).astype(np.int32)
    flat_idx = jnp.asarray(flat_idx)
    x_flat = jnp.zeros((BL, D), jnp.float32).at[flat_idx].set(
        input_feats.astype(jnp.float32))

    nobj = jnp.asarray(np.asarray(num_objs, dtype=np.int32))

    kernel = _make_encoder_kernel(bsz, L)
    full = lambda a: pl.BlockSpec(a.shape, lambda i, n: (0,) * a.ndim)

    # advisory cost estimate so XLA schedules pad/gather glue around the call
    flops = (2 * BL * D * (3 * N_HEAD * D_K)
             + bsz * N_HEAD * (2 * L * L * D_K + 2 * L * L * D_V + 2 * L * D_V * D)
             + 2 * 2 * BL * D * D_INNER)
    bytes_accessed = 4 * (x_flat.size + w_qkv.size + b_qkv.size + wo.size + bo.size
                          + w1.size + b1.size + w2.size + b2.size + ln_pack.size
                          + BL * D) + 4 * bsz

    out_flat = pl.pallas_call(
        kernel,
        out_shape=jax.ShapeDtypeStruct((BL, D), jnp.float32),
        grid_spec=pltpu.PrefetchScalarGridSpec(
            num_scalar_prefetch=1,
            grid=(1,),
            in_specs=[
                pl.BlockSpec((BL, D), lambda i, n: (0, 0)),   # flattened activations
                full(w_qkv), full(b_qkv),
                full(wo), full(bo),
                full(w1), full(b1),
                full(w2), full(b2),
                full(ln_pack),
            ],
            out_specs=pl.BlockSpec((BL, D), lambda i, n: (0, 0)),
            scratch_shapes=[pltpu.VMEM((BL, D), jnp.float32),
                            pltpu.VMEM((BL, 1), jnp.float32)],
        ),
        compiler_params=pltpu.CompilerParams(dimension_semantics=("arbitrary",)),
        cost_estimate=pl.CostEstimate(
            flops=int(flops),
            transcendentals=int(bsz * N_HEAD * L * L),
            bytes_accessed=int(bytes_accessed)),
    )(nobj, x_flat, w_qkv, b_qkv, wo, bo, w1, b1, w2, b2, ln_pack)

    # ---- enc_output[non_pad_mask]: gather valid rows back to (sum(num_objs), D) --
    return out_flat[flat_idx]


# ------------------------- pure-JAX reference (for sanity) -----------------------
def _reference(input_feats, num_objs, params):
    (wq, bq, wk, bk, wv, bv, wo, bo, g1, be1, w1, b1, w2, b2, g2, be2) = params
    bsz, L, D = len(num_objs), max(num_objs), input_feats.shape[1]
    offsets = np.cumsum([0] + list(num_objs))
    x = jnp.zeros((bsz, L, D), jnp.float32)
    for i, n in enumerate(num_objs):
        x = x.at[i, :n].set(input_feats[offsets[i]:offsets[i] + n])
    ar = np.arange(L)
    nobj = np.asarray(num_objs)[:, None]
    key_mask = jnp.asarray((ar[None, :] >= nobj))[:, None, :]            # (B,1,L)
    npad = jnp.asarray((ar[None, :] < nobj).astype(np.float32))[..., None]

    def ln(v, g, b):
        mu = jnp.mean(v, -1, keepdims=True)
        var = jnp.mean((v - mu) ** 2, -1, keepdims=True)
        return (v - mu) / jnp.sqrt(var + LN_EPS) * g + b

    q = x @ wq + bq
    k = x @ wk + bk
    v = x @ wv + bv
    q = q.reshape(bsz, L, N_HEAD, D_K).transpose(0, 2, 1, 3)
    k = k.reshape(bsz, L, N_HEAD, D_K).transpose(0, 2, 1, 3)
    v = v.reshape(bsz, L, N_HEAD, D_V).transpose(0, 2, 1, 3)
    s = jnp.einsum("bhqd,bhkd->bhqk", q, k) / math.sqrt(D_K)
    s = jnp.where(key_mask[:, None, :, :], -1e30, s)
    p = jax.nn.softmax(s, axis=-1)
    o = jnp.einsum("bhqk,bhkd->bhqd", p, v).transpose(0, 2, 1, 3).reshape(bsz, L, N_HEAD * D_V)
    o = o @ wo + bo
    y = ln(o + x, g1, be1) * npad
    h = jnp.maximum(y @ w1 + b1, 0.0) @ w2 + b2
    z = ln(h + y, g2, be2) * npad
    flat_idx = np.concatenate([i * L + np.arange(n) for i, n in enumerate(num_objs)])
    return z.reshape(bsz * L, D)[jnp.asarray(flat_idx)]


# --------------------------------- main -------------------------------------------
if __name__ == "__main__":
    key = jax.random.PRNGKey(0)
    ks = jax.random.split(key, 12)

    # deterministic synthetic parameters (shapes match the module's __init__)
    wq = 0.1 * jax.random.normal(ks[0], (D_MODEL, N_HEAD * D_K), jnp.float32)
    bq = jnp.zeros((1, N_HEAD * D_K), jnp.float32)
    wk = 0.1 * jax.random.normal(ks[1], (D_MODEL, N_HEAD * D_K), jnp.float32)
    bk = jnp.zeros((1, N_HEAD * D_K), jnp.float32)
    wv = 0.1 * jax.random.normal(ks[2], (D_MODEL, N_HEAD * D_V), jnp.float32)
    bv = jnp.zeros((1, N_HEAD * D_V), jnp.float32)
    wo = 0.1 * jax.random.normal(ks[3], (N_HEAD * D_V, D_MODEL), jnp.float32)
    bo = 0.01 * jax.random.normal(ks[4], (1, D_MODEL), jnp.float32)
    g1 = jnp.ones((1, D_MODEL), jnp.float32)
    be1 = jnp.zeros((1, D_MODEL), jnp.float32)
    w1 = 0.1 * jax.random.normal(ks[5], (D_MODEL, D_INNER), jnp.float32)
    b1 = 0.01 * jax.random.normal(ks[6], (1, D_INNER), jnp.float32)
    w2 = 0.1 * jax.random.normal(ks[7], (D_INNER, D_MODEL), jnp.float32)
    b2 = 0.01 * jax.random.normal(ks[8], (1, D_MODEL), jnp.float32)
    g2 = jnp.ones((1, D_MODEL), jnp.float32)
    be2 = jnp.zeros((1, D_MODEL), jnp.float32)
    params = (wq, bq, wk, bk, wv, bv, wo, bo, g1, be1, w1, b1, w2, b2, g2, be2)

    # ragged input: num_objs per image, total 16 object features of dim D_MODEL
    num_objs = [5, 8, 3]
    total = sum(num_objs)
    input_feats = jax.random.normal(ks[9], (total, D_MODEL), jnp.float32)

    out = self_attention_encoder(input_feats, num_objs, params)
    out = jax.block_until_ready(out)

    ref = _reference(input_feats, num_objs, params)
    assert out.shape == (total, D_MODEL)
    # tolerance loosened slightly because softmax uses the EUP approx reciprocal
    np.testing.assert_allclose(np.asarray(out), np.asarray(ref), rtol=2e-3, atol=2e-3)

    print("KERNEL_OK")
</pallas_src>

<mosaic_0001>
module attributes {stable_mosaic.version = 11 : i64} {
  func.func @kernel(%arg0: i32, %arg1: memref<3xi32, #tpu.memory_space<smem>>, %arg2: memref<24x32xf32, #tpu.memory_space<vmem>>, %arg3: memref<32x96xf32, #tpu.memory_space<vmem>>, %arg4: memref<1x96xf32, #tpu.memory_space<vmem>>, %arg5: memref<32x32xf32, #tpu.memory_space<vmem>>, %arg6: memref<1x32xf32, #tpu.memory_space<vmem>>, %arg7: memref<32x64xf32, #tpu.memory_space<vmem>>, %arg8: memref<1x64xf32, #tpu.memory_space<vmem>>, %arg9: memref<64x32xf32, #tpu.memory_space<vmem>>, %arg10: memref<1x32xf32, #tpu.memory_space<vmem>>, %arg11: memref<4x32xf32, #tpu.memory_space<vmem>>, %arg12: memref<24x32xf32, #tpu.memory_space<vmem>>, %arg13: memref<24x32xf32, #tpu.memory_space<vmem>>, %arg14: memref<24x1xf32, #tpu.memory_space<vmem>>) attributes {dimension_semantics = [#tpu.dimension_semantics<arbitrary>], iteration_bounds = array<i64: 1>, scalar_prefetch = 1 : i64, scratch_operands = 2 : i64, tpu.core_type = #tpu.core_type<tc>, window_params = [{pipeline_mode = #tpu.pipeline_mode<synchronous>, transform_indices = @transform_0, window_bounds = array<i64: 24, 32>}, {pipeline_mode = #tpu.pipeline_mode<synchronous>, transform_indices = @transform_1, window_bounds = array<i64: 32, 96>}, {pipeline_mode = #tpu.pipeline_mode<synchronous>, transform_indices = @transform_2, window_bounds = array<i64: 1, 96>}, {pipeline_mode = #tpu.pipeline_mode<synchronous>, transform_indices = @transform_3, window_bounds = array<i64: 32, 32>}, {pipeline_mode = #tpu.pipeline_mode<synchronous>, transform_indices = @transform_4, window_bounds = array<i64: 1, 32>}, {pipeline_mode = #tpu.pipeline_mode<synchronous>, transform_indices = @transform_5, window_bounds = array<i64: 32, 64>}, {pipeline_mode = #tpu.pipeline_mode<synchronous>, transform_indices = @transform_6, window_bounds = array<i64: 1, 64>}, {pipeline_mode = #tpu.pipeline_mode<synchronous>, transform_indices = @transform_7, window_bounds = array<i64: 64, 32>}, {pipeline_mode = #tpu.pipeline_mode<synchronous>, transform_indices = @transform_8, window_bounds = array<i64: 1, 32>}, {pipeline_mode = #tpu.pipeline_mode<synchronous>, transform_indices = @transform_9, window_bounds = array<i64: 4, 32>}, {pipeline_mode = #tpu.pipeline_mode<synchronous>, transform_indices = @transform_10, window_bounds = array<i64: 24, 32>}]} {
    %c0 = arith.constant 0 : index
    %c0_0 = arith.constant 0 : index
    %0 = vector.load %arg2[%c0, %c0_0] : memref<24x32xf32, #tpu.memory_space<vmem>>, vector<24x32xf32>
    %c0_1 = arith.constant 0 : index
    %c0_2 = arith.constant 0 : index
    %1 = vector.load %arg3[%c0_1, %c0_2] : memref<32x96xf32, #tpu.memory_space<vmem>>, vector<32x96xf32>
    %cst = arith.constant dense<0.000000e+00> : vector<24x96xf32>
    %2 = tpu.matmul %0, %1, %cst {dimension_numbers = #tpu.dot_dimension_numbers<[1], [0], [0], [1], [0, 0, 1, 1], [], []>} : vector<24x32xf32>, vector<32x96xf32>, vector<24x96xf32> -> vector<24x96xf32>
    %c0_3 = arith.constant 0 : index
    %c0_4 = arith.constant 0 : index
    %3 = vector.load %arg4[%c0_3, %c0_4] : memref<1x96xf32, #tpu.memory_space<vmem>>, vector<1x96xf32>
    %4 = vector.broadcast %3 : vector<1x96xf32> to vector<24x96xf32>
    %5 = arith.addf %2, %4 : vector<24x96xf32>
    %c0_5 = arith.constant 0 : index
    %6 = memref.load %arg1[%c0_5] : memref<3xi32, #tpu.memory_space<smem>>
    %7 = tpu.iota {dimensions = array<i32: 1>} : vector<8x8xi32>
    %8 = vector.broadcast %6 : i32 to vector<8x8xi32>
    %9 = arith.cmpi sge, %7, %8 : vector<8x8xi32>
    %cst_6 = arith.constant -1.000000e+30 : f32
    %cst_7 = arith.constant 0.000000e+00 : f32
    %10 = vector.broadcast %cst_6 : f32 to vector<8x8xf32>
    %11 = vector.broadcast %cst_7 : f32 to vector<8x8xf32>
    %12 = arith.select %9, %10, %11 : vector<8x8xi1>, vector<8x8xf32>
    %13 = tpu.iota {dimensions = array<i32: 0>} : vector<8x1xi32>
    %14 = vector.broadcast %6 : i32 to vector<8x1xi32>
    %15 = arith.cmpi slt, %13, %14 : vector<8x1xi32>
    %16 = arith.extui %15 : vector<8x1xi1> to vector<8x1xi32>
    %17 = arith.sitofp %16 : vector<8x1xi32> to vector<8x1xf32>
    %c0_8 = arith.constant 0 : index
    %c0_9 = arith.constant 0 : index
    %18 = vector.load %arg14[%c0_8, %c0_9] : memref<24x1xf32, #tpu.memory_space<vmem>>, vector<8x1xf32>
    tpu.vector_store %arg14[%c0_8, %c0_9], %17 {strides = array<i32>} : memref<24x1xf32, #tpu.memory_space<vmem>>, vector<8x1xf32>,
    %cst_10 = arith.constant 0.000000e+00 : f32
    %19 = vector.broadcast %cst_10 : f32 to vector<8x32xf32>
    %20 = vector.extract_strided_slice %5 {offsets = [0, 0], sizes = [8, 16], strides = [1, 1]} : vector<24x96xf32> to vector<8x16xf32>
    %21 = vector.extract_strided_slice %5 {offsets = [0, 32], sizes = [8, 16], strides = [1, 1]} : vector<24x96xf32> to vector<8x16xf32>
    %22 = vector.extract_strided_slice %5 {offsets = [0, 64], sizes = [8, 16], strides = [1, 1]} : vector<24x96xf32> to vector<8x16xf32>
    %cst_11 = arith.constant dense<0.000000e+00> : vector<8x8xf32>
    %23 = tpu.matmul %20, %21, %cst_11 {dimension_numbers = #tpu.dot_dimension_numbers<[1], [1], [0], [0], [0, 0, 1, 0], [], []>} : vector<8x16xf32>, vector<8x16xf32>, vector<8x8xf32> -> vector<8x8xf32>
    %cst_12 = arith.constant 2.500000e-01 : f32
    %24 = vector.broadcast %cst_12 : f32 to vector<8x8xf32>
    %25 = arith.mulf %23, %24 : vector<8x8xf32>
    %26 = arith.addf %25, %12 : vector<8x8xf32>
    %cst_13 = arith.constant dense<0xFF800000> : vector<8xf32>
    %27 = vector.multi_reduction <maximumf>, %26, %cst_13 [1] : vector<8x8xf32> to vector<8xf32>
    %28 = vector.shape_cast %27 : vector<8xf32> to vector<8x1xf32>
    %29 = vector.broadcast %28 : vector<8x1xf32> to vector<8x8xf32>
    %30 = arith.subf %26, %29 : vector<8x8xf32>
    %31 = math.exp %30 : vector<8x8xf32>
    %cst_14 = arith.constant dense<0.000000e+00> : vector<8xf32>
    %32 = vector.multi_reduction <add>, %31, %cst_14 [1] : vector<8x8xf32> to vector<8xf32>
    %33 = vector.shape_cast %32 : vector<8xf32> to vector<8x1xf32>
    %34 = tpu.reciprocal %33 {approx = true} : vector<8x1xf32> -> vector<8x1xf32>
    %35 = vector.broadcast %34 : vector<8x1xf32> to vector<8x8xf32>
    %36 = arith.mulf %31, %35 : vector<8x8xf32>
    %cst_15 = arith.constant dense<0.000000e+00> : vector<8x16xf32>
    %37 = tpu.matmul %36, %22, %cst_15 {dimension_numbers = #tpu.dot_dimension_numbers<[1], [0], [0], [1], [0, 0, 1, 1], [], []>} : vector<8x8xf32>, vector<8x16xf32>, vector<8x16xf32> -> vector<8x16xf32>
    %c0_16 = arith.constant 0 : index
    %c0_17 = arith.constant 0 : index
    %38 = vector.load %arg5[%c0_16, %c0_17] : memref<32x32xf32, #tpu.memory_space<vmem>>, vector<16x32xf32>
    %cst_18 = arith.constant dense<0.000000e+00> : vector<8x32xf32>
    %39 = tpu.matmul %37, %38, %cst_18 {dimension_numbers = #tpu.dot_dimension_numbers<[1], [0], [0], [1], [0, 0, 1, 1], [], []>} : vector<8x16xf32>, vector<16x32xf32>, vector<8x32xf32> -> vector<8x32xf32>
    %40 = arith.addf %19, %39 : vector<8x32xf32>
    %41 = vector.extract_strided_slice %5 {offsets = [0, 16], sizes = [8, 16], strides = [1, 1]} : vector<24x96xf32> to vector<8x16xf32>
    %42 = vector.extract_strided_slice %5 {offsets = [0, 48], sizes = [8, 16], strides = [1, 1]} : vector<24x96xf32> to vector<8x16xf32>
    %43 = vector.extract_strided_slice %5 {offsets = [0, 80], sizes = [8, 16], strides = [1, 1]} : vector<24x96xf32> to vector<8x16xf32>
    %cst_19 = arith.constant dense<0.000000e+00> : vector<8x8xf32>
    %44 = tpu.matmul %41, %42, %cst_19 {dimension_numbers = #tpu.dot_dimension_numbers<[1], [1], [0], [0], [0, 0, 1, 0], [], []>} : vector<8x16xf32>, vector<8x16xf32>, vector<8x8xf32> -> vector<8x8xf32>
    %cst_20 = arith.constant 2.500000e-01 : f32
    %45 = vector.broadcast %cst_20 : f32 to vector<8x8xf32>
    %46 = arith.mulf %44, %45 : vector<8x8xf32>
    %47 = arith.addf %46, %12 : vector<8x8xf32>
    %cst_21 = arith.constant dense<0xFF800000> : vector<8xf32>
    %48 = vector.multi_reduction <maximumf>, %47, %cst_21 [1] : vector<8x8xf32> to vector<8xf32>
    %49 = vector.shape_cast %48 : vector<8xf32> to vector<8x1xf32>
    %50 = vector.broadcast %49 : vector<8x1xf32> to vector<8x8xf32>
    %51 = arith.subf %47, %50 : vector<8x8xf32>
    %52 = math.exp %51 : vector<8x8xf32>
    %cst_22 = arith.constant dense<0.000000e+00> : vector<8xf32>
    %53 = vector.multi_reduction <add>, %52, %cst_22 [1] : vector<8x8xf32> to vector<8xf32>
    %54 = vector.shape_cast %53 : vector<8xf32> to vector<8x1xf32>
    %55 = tpu.reciprocal %54 {approx = true} : vector<8x1xf32> -> vector<8x1xf32>
    %56 = vector.broadcast %55 : vector<8x1xf32> to vector<8x8xf32>
    %57 = arith.mulf %52, %56 : vector<8x8xf32>
    %cst_23 = arith.constant dense<0.000000e+00> : vector<8x16xf32>
    %58 = tpu.matmul %57, %43, %cst_23 {dimension_numbers = #tpu.dot_dimension_numbers<[1], [0], [0], [1], [0, 0, 1, 1], [], []>} : vector<8x8xf32>, vector<8x16xf32>, vector<8x16xf32> -> vector<8x16xf32>
    %c16 = arith.constant 16 : index
    %c0_24 = arith.constant 0 : index
    %59 = vector.load %arg5[%c16, %c0_24] : memref<32x32xf32, #tpu.memory_space<vmem>>, vector<16x32xf32>
    %cst_25 = arith.constant dense<0.000000e+00> : vector<8x32xf32>
    %60 = tpu.matmul %58, %59, %cst_25 {dimension_numbers = #tpu.dot_dimension_numbers<[1], [0], [0], [1], [0, 0, 1, 1], [], []>} : vector<8x16xf32>, vector<16x32xf32>, vector<8x32xf32> -> vector<8x32xf32>
    %61 = arith.addf %40, %60 : vector<8x32xf32>
    %c0_26 = arith.constant 0 : index
    %c0_27 = arith.constant 0 : index
    %62 = vector.load %arg13[%c0_26, %c0_27] : memref<24x32xf32, #tpu.memory_space<vmem>>, vector<8x32xf32>
    tpu.vector_store %arg13[%c0_26, %c0_27], %61 {strides = array<i32>} : memref<24x32xf32, #tpu.memory_space<vmem>>, vector<8x32xf32>,
    %c1 = arith.constant 1 : index
    %63 = memref.load %arg1[%c1] : memref<3xi32, #tpu.memory_space<smem>>
    %64 = tpu.iota {dimensions = array<i32: 1>} : vector<8x8xi32>
    %65 = vector.broadcast %63 : i32 to vector<8x8xi32>
    %66 = arith.cmpi sge, %64, %65 : vector<8x8xi32>
    %cst_28 = arith.constant -1.000000e+30 : f32
    %cst_29 = arith.constant 0.000000e+00 : f32
    %67 = vector.broadcast %cst_28 : f32 to vector<8x8xf32>
    %68 = vector.broadcast %cst_29 : f32 to vector<8x8xf32>
    %69 = arith.select %66, %67, %68 : vector<8x8xi1>, vector<8x8xf32>
    %70 = tpu.iota {dimensions = array<i32: 0>} : vector<8x1xi32>
    %71 = vector.broadcast %63 : i32 to vector<8x1xi32>
    %72 = arith.cmpi slt, %70, %71 : vector<8x1xi32>
    %73 = arith.extui %72 : vector<8x1xi1> to vector<8x1xi32>
    %74 = arith.sitofp %73 : vector<8x1xi32> to vector<8x1xf32>
    %c8 = arith.constant 8 : index
    %c0_30 = arith.constant 0 : index
    %75 = vector.load %arg14[%c8, %c0_30] : memref<24x1xf32, #tpu.memory_space<vmem>>, vector<8x1xf32>
    tpu.vector_store %arg14[%c8, %c0_30], %74 {strides = array<i32>} : memref<24x1xf32, #tpu.memory_space<vmem>>, vector<8x1xf32>,
    %cst_31 = arith.constant 0.000000e+00 : f32
    %76 = vector.broadcast %cst_31 : f32 to vector<8x32xf32>
    %77 = vector.extract_strided_slice %5 {offsets = [8, 0], sizes = [8, 16], strides = [1, 1]} : vector<24x96xf32> to vector<8x16xf32>
    %78 = vector.extract_strided_slice %5 {offsets = [8, 32], sizes = [8, 16], strides = [1, 1]} : vector<24x96xf32> to vector<8x16xf32>
    %79 = vector.extract_strided_slice %5 {offsets = [8, 64], sizes = [8, 16], strides = [1, 1]} : vector<24x96xf32> to vector<8x16xf32>
    %cst_32 = arith.constant dense<0.000000e+00> : vector<8x8xf32>
    %80 = tpu.matmul %77, %78, %cst_32 {dimension_numbers = #tpu.dot_dimension_numbers<[1], [1], [0], [0], [0, 0, 1, 0], [], []>} : vector<8x16xf32>, vector<8x16xf32>, vector<8x8xf32> -> vector<8x8xf32>
    %cst_33 = arith.constant 2.500000e-01 : f32
    %81 = vector.broadcast %cst_33 : f32 to vector<8x8xf32>
    %82 = arith.mulf %80, %81 : vector<8x8xf32>
    %83 = arith.addf %82, %69 : vector<8x8xf32>
    %cst_34 = arith.constant dense<0xFF800000> : vector<8xf32>
    %84 = vector.multi_reduction <maximumf>, %83, %cst_34 [1] : vector<8x8xf32> to vector<8xf32>
    %85 = vector.shape_cast %84 : vector<8xf32> to vector<8x1xf32>
    %86 = vector.broadcast %85 : vector<8x1xf32> to vector<8x8xf32>
    %87 = arith.subf %83, %86 : vector<8x8xf32>
    %88 = math.exp %87 : vector<8x8xf32>
    %cst_35 = arith.constant dense<0.000000e+00> : vector<8xf32>
    %89 = vector.multi_reduction <add>, %88, %cst_35 [1] : vector<8x8xf32> to vector<8xf32>
    %90 = vector.shape_cast %89 : vector<8xf32> to vector<8x1xf32>
    %91 = tpu.reciprocal %90 {approx = true} : vector<8x1xf32> -> vector<8x1xf32>
    %92 = vector.broadcast %91 : vector<8x1xf32> to vector<8x8xf32>
    %93 = arith.mulf %88, %92 : vector<8x8xf32>
    %cst_36 = arith.constant dense<0.000000e+00> : vector<8x16xf32>
    %94 = tpu.matmul %93, %79, %cst_36 {dimension_numbers = #tpu.dot_dimension_numbers<[1], [0], [0], [1], [0, 0, 1, 1], [], []>} : vector<8x8xf32>, vector<8x16xf32>, vector<8x16xf32> -> vector<8x16xf32>
    %c0_37 = arith.constant 0 : index
    %c0_38 = arith.constant 0 : index
    %95 = vector.load %arg5[%c0_37, %c0_38] : memref<32x32xf32, #tpu.memory_space<vmem>>, vector<16x32xf32>
    %cst_39 = arith.constant dense<0.000000e+00> : vector<8x32xf32>
    %96 = tpu.matmul %94, %95, %cst_39 {dimension_numbers = #tpu.dot_dimension_numbers<[1], [0], [0], [1], [0, 0, 1, 1], [], []>} : vector<8x16xf32>, vector<16x32xf32>, vector<8x32xf32> -> vector<8x32xf32>
    %97 = arith.addf %76, %96 : vector<8x32xf32>
    %98 = vector.extract_strided_slice %5 {offsets = [8, 16], sizes = [8, 16], strides = [1, 1]} : vector<24x96xf32> to vector<8x16xf32>
    %99 = vector.extract_strided_slice %5 {offsets = [8, 48], sizes = [8, 16], strides = [1, 1]} : vector<24x96xf32> to vector<8x16xf32>
    %100 = vector.extract_strided_slice %5 {offsets = [8, 80], sizes = [8, 16], strides = [1, 1]} : vector<24x96xf32> to vector<8x16xf32>
    %cst_40 = arith.constant dense<0.000000e+00> : vector<8x8xf32>
    %101 = tpu.matmul %98, %99, %cst_40 {dimension_numbers = #tpu.dot_dimension_numbers<[1], [1], [0], [0], [0, 0, 1, 0], [], []>} : vector<8x16xf32>, vector<8x16xf32>, vector<8x8xf32> -> vector<8x8xf32>
    %cst_41 = arith.constant 2.500000e-01 : f32
    %102 = vector.broadcast %cst_41 : f32 to vector<8x8xf32>
    %103 = arith.mulf %101, %102 : vector<8x8xf32>
    %104 = arith.addf %103, %69 : vector<8x8xf32>
    %cst_42 = arith.constant dense<0xFF800000> : vector<8xf32>
    %105 = vector.multi_reduction <maximumf>, %104, %cst_42 [1] : vector<8x8xf32> to vector<8xf32>
    %106 = vector.shape_cast %105 : vector<8xf32> to vector<8x1xf32>
    %107 = vector.broadcast %106 : vector<8x1xf32> to vector<8x8xf32>
    %108 = arith.subf %104, %107 : vector<8x8xf32>
    %109 = math.exp %108 : vector<8x8xf32>
    %cst_43 = arith.constant dense<0.000000e+00> : vector<8xf32>
    %110 = vector.multi_reduction <add>, %109, %cst_43 [1] : vector<8x8xf32> to vector<8xf32>
    %111 = vector.shape_cast %110 : vector<8xf32> to vector<8x1xf32>
    %112 = tpu.reciprocal %111 {approx = true} : vector<8x1xf32> -> vector<8x1xf32>
    %113 = vector.broadcast %112 : vector<8x1xf32> to vector<8x8xf32>
    %114 = arith.mulf %109, %113 : vector<8x8xf32>
    %cst_44 = arith.constant dense<0.000000e+00> : vector<8x16xf32>
    %115 = tpu.matmul %114, %100, %cst_44 {dimension_numbers = #tpu.dot_dimension_numbers<[1], [0], [0], [1], [0, 0, 1, 1], [], []>} : vector<8x8xf32>, vector<8x16xf32>, vector<8x16xf32> -> vector<8x16xf32>
    %c16_45 = arith.constant 16 : index
    %c0_46 = arith.constant 0 : index
    %116 = vector.load %arg5[%c16_45, %c0_46] : memref<32x32xf32, #tpu.memory_space<vmem>>, vector<16x32xf32>
    %cst_47 = arith.constant dense<0.000000e+00> : vector<8x32xf32>
    %117 = tpu.matmul %115, %116, %cst_47 {dimension_numbers = #tpu.dot_dimension_numbers<[1], [0], [0], [1], [0, 0, 1, 1], [], []>} : vector<8x16xf32>, vector<16x32xf32>, vector<8x32xf32> -> vector<8x32xf32>
    %118 = arith.addf %97, %117 : vector<8x32xf32>
    %c8_48 = arith.constant 8 : index
    %c0_49 = arith.constant 0 : index
    %119 = vector.load %arg13[%c8_48, %c0_49] : memref<24x32xf32, #tpu.memory_space<vmem>>, vector<8x32xf32>
    tpu.vector_store %arg13[%c8_48, %c0_49], %118 {strides = array<i32>} : memref<24x32xf32, #tpu.memory_space<vmem>>, vector<8x32xf32>,
    %c2 = arith.constant 2 : index
    %120 = memref.load %arg1[%c2] : memref<3xi32, #tpu.memory_space<smem>>
    %121 = tpu.iota {dimensions = array<i32: 1>} : vector<8x8xi32>
    %122 = vector.broadcast %120 : i32 to vector<8x8xi32>
    %123 = arith.cmpi sge, %121, %122 : vector<8x8xi32>
    %cst_50 = arith.constant -1.000000e+30 : f32
    %cst_51 = arith.constant 0.000000e+00 : f32
    %124 = vector.broadcast %cst_50 : f32 to vector<8x8xf32>
    %125 = vector.broadcast %cst_51 : f32 to vector<8x8xf32>
    %126 = arith.select %123, %124, %125 : vector<8x8xi1>, vector<8x8xf32>
    %127 = tpu.iota {dimensions = array<i32: 0>} : vector<8x1xi32>
    %128 = vector.broadcast %120 : i32 to vector<8x1xi32>
    %129 = arith.cmpi slt, %127, %128 : vector<8x1xi32>
    %130 = arith.extui %129 : vector<8x1xi1> to vector<8x1xi32>
    %131 = arith.sitofp %130 : vector<8x1xi32> to vector<8x1xf32>
    %c16_52 = arith.constant 16 : index
    %c0_53 = arith.constant 0 : index
    %132 = vector.load %arg14[%c16_52, %c0_53] : memref<24x1xf32, #tpu.memory_space<vmem>>, vector<8x1xf32>
    tpu.vector_store %arg14[%c16_52, %c0_53], %131 {strides = array<i32>} : memref<24x1xf32, #tpu.memory_space<vmem>>, vector<8x1xf32>,
    %cst_54 = arith.constant 0.000000e+00 : f32
    %133 = vector.broadcast %cst_54 : f32 to vector<8x32xf32>
    %134 = vector.extract_strided_slice %5 {offsets = [16, 0], sizes = [8, 16], strides = [1, 1]} : vector<24x96xf32> to vector<8x16xf32>
    %135 = vector.extract_strided_slice %5 {offsets = [16, 32], sizes = [8, 16], strides = [1, 1]} : vector<24x96xf32> to vector<8x16xf32>
    %136 = vector.extract_strided_slice %5 {offsets = [16, 64], sizes = [8, 16], strides = [1, 1]} : vector<24x96xf32> to vector<8x16xf32>
    %cst_55 = arith.constant dense<0.000000e+00> : vector<8x8xf32>
    %137 = tpu.matmul %134, %135, %cst_55 {dimension_numbers = #tpu.dot_dimension_numbers<[1], [1], [0], [0], [0, 0, 1, 0], [], []>} : vector<8x16xf32>, vector<8x16xf32>, vector<8x8xf32> -> vector<8x8xf32>
    %cst_56 = arith.constant 2.500000e-01 : f32
    %138 = vector.broadcast %cst_56 : f32 to vector<8x8xf32>
    %139 = arith.mulf %137, %138 : vector<8x8xf32>
    %140 = arith.addf %139, %126 : vector<8x8xf32>
    %cst_57 = arith.constant dense<0xFF800000> : vector<8xf32>
    %141 = vector.multi_reduction <maximumf>, %140, %cst_57 [1] : vector<8x8xf32> to vector<8xf32>
    %142 = vector.shape_cast %141 : vector<8xf32> to vector<8x1xf32>
    %143 = vector.broadcast %142 : vector<8x1xf32> to vector<8x8xf32>
    %144 = arith.subf %140, %143 : vector<8x8xf32>
    %145 = math.exp %144 : vector<8x8xf32>
    %cst_58 = arith.constant dense<0.000000e+00> : vector<8xf32>
    %146 = vector.multi_reduction <add>, %145, %cst_58 [1] : vector<8x8xf32> to vector<8xf32>
    %147 = vector.shape_cast %146 : vector<8xf32> to vector<8x1xf32>
    %148 = tpu.reciprocal %147 {approx = true} : vector<8x1xf32> -> vector<8x1xf32>
    %149 = vector.broadcast %148 : vector<8x1xf32> to vector<8x8xf32>
    %150 = arith.mulf %145, %149 : vector<8x8xf32>
    %cst_59 = arith.constant dense<0.000000e+00> : vector<8x16xf32>
    %151 = tpu.matmul %150, %136, %cst_59 {dimension_numbers = #tpu.dot_dimension_numbers<[1], [0], [0], [1], [0, 0, 1, 1], [], []>} : vector<8x8xf32>, vector<8x16xf32>, vector<8x16xf32> -> vector<8x16xf32>
    %c0_60 = arith.constant 0 : index
    %c0_61 = arith.constant 0 : index
    %152 = vector.load %arg5[%c0_60, %c0_61] : memref<32x32xf32, #tpu.memory_space<vmem>>, vector<16x32xf32>
    %cst_62 = arith.constant dense<0.000000e+00> : vector<8x32xf32>
    %153 = tpu.matmul %151, %152, %cst_62 {dimension_numbers = #tpu.dot_dimension_numbers<[1], [0], [0], [1], [0, 0, 1, 1], [], []>} : vector<8x16xf32>, vector<16x32xf32>, vector<8x32xf32> -> vector<8x32xf32>
    %154 = arith.addf %133, %153 : vector<8x32xf32>
    %155 = vector.extract_strided_slice %5 {offsets = [16, 16], sizes = [8, 16], strides = [1, 1]} : vector<24x96xf32> to vector<8x16xf32>
    %156 = vector.extract_strided_slice %5 {offsets = [16, 48], sizes = [8, 16], strides = [1, 1]} : vector<24x96xf32> to vector<8x16xf32>
    %157 = vector.extract_strided_slice %5 {offsets = [16, 80], sizes = [8, 16], strides = [1, 1]} : vector<24x96xf32> to vector<8x16xf32>
    %cst_63 = arith.constant dense<0.000000e+00> : vector<8x8xf32>
    %158 = tpu.matmul %155, %156, %cst_63 {dimension_numbers = #tpu.dot_dimension_numbers<[1], [1], [0], [0], [0, 0, 1, 0], [], []>} : vector<8x16xf32>, vector<8x16xf32>, vector<8x8xf32> -> vector<8x8xf32>
    %cst_64 = arith.constant 2.500000e-01 : f32
    %159 = vector.broadcast %cst_64 : f32 to vector<8x8xf32>
    %160 = arith.mulf %158, %159 : vector<8x8xf32>
    %161 = arith.addf %160, %126 : vector<8x8xf32>
    %cst_65 = arith.constant dense<0xFF800000> : vector<8xf32>
    %162 = vector.multi_reduction <maximumf>, %161, %cst_65 [1] : vector<8x8xf32> to vector<8xf32>
    %163 = vector.shape_cast %162 : vector<8xf32> to vector<8x1xf32>
    %164 = vector.broadcast %163 : vector<8x1xf32> to vector<8x8xf32>
    %165 = arith.subf %161, %164 : vector<8x8xf32>
    %166 = math.exp %165 : vector<8x8xf32>
    %cst_66 = arith.constant dense<0.000000e+00> : vector<8xf32>
    %167 = vector.multi_reduction <add>, %166, %cst_66 [1] : vector<8x8xf32> to vector<8xf32>
    %168 = vector.shape_cast %167 : vector<8xf32> to vector<8x1xf32>
    %169 = tpu.reciprocal %168 {approx = true} : vector<8x1xf32> -> vector<8x1xf32>
    %170 = vector.broadcast %169 : vector<8x1xf32> to vector<8x8xf32>
    %171 = arith.mulf %166, %170 : vector<8x8xf32>
    %cst_67 = arith.constant dense<0.000000e+00> : vector<8x16xf32>
    %172 = tpu.matmul %171, %157, %cst_67 {dimension_numbers = #tpu.dot_dimension_numbers<[1], [0], [0], [1], [0, 0, 1, 1], [], []>} : vector<8x8xf32>, vector<8x16xf32>, vector<8x16xf32> -> vector<8x16xf32>
    %c16_68 = arith.constant 16 : index
    %c0_69 = arith.constant 0 : index
    %173 = vector.load %arg5[%c16_68, %c0_69] : memref<32x32xf32, #tpu.memory_space<vmem>>, vector<16x32xf32>
    %cst_70 = arith.constant dense<0.000000e+00> : vector<8x32xf32>
    %174 = tpu.matmul %172, %173, %cst_70 {dimension_numbers = #tpu.dot_dimension_numbers<[1], [0], [0], [1], [0, 0, 1, 1], [], []>} : vector<8x16xf32>, vector<16x32xf32>, vector<8x32xf32> -> vector<8x32xf32>
    %175 = arith.addf %154, %174 : vector<8x32xf32>
    %c16_71 = arith.constant 16 : index
    %c0_72 = arith.constant 0 : index
    %176 = vector.load %arg13[%c16_71, %c0_72] : memref<24x32xf32, #tpu.memory_space<vmem>>, vector<8x32xf32>
    tpu.vector_store %arg13[%c16_71, %c0_72], %175 {strides = array<i32>} : memref<24x32xf32, #tpu.memory_space<vmem>>, vector<8x32xf32>,
    %c0_73 = arith.constant 0 : index
    %c0_74 = arith.constant 0 : index
    %177 = vector.load %arg14[%c0_73, %c0_74] : memref<24x1xf32, #tpu.memory_space<vmem>>, vector<24x1xf32>
    %c0_75 = arith.constant 0 : index
    %c0_76 = arith.constant 0 : index
    %178 = vector.load %arg13[%c0_75, %c0_76] : memref<24x32xf32, #tpu.memory_space<vmem>>, vector<24x32xf32>
    %c0_77 = arith.constant 0 : index
    %c0_78 = arith.constant 0 : index
    %179 = vector.load %arg6[%c0_77, %c0_78] : memref<1x32xf32, #tpu.memory_space<vmem>>, vector<1x32xf32>
    %180 = vector.broadcast %179 : vector<1x32xf32> to vector<24x32xf32>
    %181 = arith.addf %178, %180 : vector<24x32xf32>
    %182 = arith.addf %181, %0 : vector<24x32xf32>
    %cst_79 = arith.constant dense<0.000000e+00> : vector<24xf32>
    %183 = vector.multi_reduction <add>, %182, %cst_79 [1] : vector<24x32xf32> to vector<24xf32>
    %184 = vector.shape_cast %183 : vector<24xf32> to vector<24x1xf32>
    %cst_80 = arith.constant 3.200000e+01 : f32
    %185 = vector.broadcast %cst_80 : f32 to vector<24x1xf32>
    %186 = arith.divf %184, %185 : vector<24x1xf32>
    %187 = vector.broadcast %186 : vector<24x1xf32> to vector<24x32xf32>
    %188 = arith.subf %182, %187 : vector<24x32xf32>
    %189 = arith.mulf %188, %188 : vector<24x32xf32>
    %cst_81 = arith.constant dense<0.000000e+00> : vector<24xf32>
    %190 = vector.multi_reduction <add>, %189, %cst_81 [1] : vector<24x32xf32> to vector<24xf32>
    %191 = vector.shape_cast %190 : vector<24xf32> to vector<24x1xf32>
    %cst_82 = arith.constant 3.200000e+01 : f32
    %192 = vector.broadcast %cst_82 : f32 to vector<24x1xf32>
    %193 = arith.divf %191, %192 : vector<24x1xf32>
    %194 = vector.broadcast %186 : vector<24x1xf32> to vector<24x32xf32>
    %195 = arith.subf %182, %194 : vector<24x32xf32>
    %cst_83 = arith.constant 9.99999974E-6 : f32
    %196 = vector.broadcast %cst_83 : f32 to vector<24x1xf32>
    %197 = arith.addf %193, %196 : vector<24x1xf32>
    %198 = math.rsqrt %197 : vector<24x1xf32>
    %199 = vector.broadcast %198 : vector<24x1xf32> to vector<24x32xf32>
    %200 = arith.mulf %195, %199 : vector<24x32xf32>
    %c0_84 = arith.constant 0 : index
    %c0_85 = arith.constant 0 : index
    %201 = vector.load %arg11[%c0_84, %c0_85] : memref<4x32xf32, #tpu.memory_space<vmem>>, vector<1x32xf32>
    %202 = vector.broadcast %201 : vector<1x32xf32> to vector<24x32xf32>
    %203 = arith.mulf %200, %202 : vector<24x32xf32>
    %c1_86 = arith.constant 1 : index
    %c0_87 = arith.constant 0 : index
    %204 = vector.load %arg11[%c1_86, %c0_87] : memref<4x32xf32, #tpu.memory_space<vmem>>, vector<1x32xf32>
    %205 = vector.broadcast %204 : vector<1x32xf32> to vector<24x32xf32>
    %206 = arith.addf %203, %205 : vector<24x32xf32>
    %207 = vector.broadcast %177 : vector<24x1xf32> to vector<24x32xf32>
    %208 = arith.mulf %206, %207 : vector<24x32xf32>
    %c0_88 = arith.constant 0 : index
    %c0_89 = arith.constant 0 : index
    %209 = vector.load %arg7[%c0_88, %c0_89] : memref<32x64xf32, #tpu.memory_space<vmem>>, vector<32x64xf32>
    %cst_90 = arith.constant dense<0.000000e+00> : vector<24x64xf32>
    %210 = tpu.matmul %208, %209, %cst_90 {dimension_numbers = #tpu.dot_dimension_numbers<[1], [0], [0], [1], [0, 0, 1, 1], [], []>} : vector<24x32xf32>, vector<32x64xf32>, vector<24x64xf32> -> vector<24x64xf32>
    %c0_91 = arith.constant 0 : index
    %c0_92 = arith.constant 0 : index
    %211 = vector.load %arg8[%c0_91, %c0_92] : memref<1x64xf32, #tpu.memory_space<vmem>>, vector<1x64xf32>
    %212 = vector.broadcast %211 : vector<1x64xf32> to vector<24x64xf32>
    %213 = arith.addf %210, %212 : vector<24x64xf32>
    %cst_93 = arith.constant 0.000000e+00 : f32
    %214 = vector.broadcast %cst_93 : f32 to vector<24x64xf32>
    %215 = arith.maximumf %213, %214 : vector<24x64xf32>
    %c0_94 = arith.constant 0 : index
    %c0_95 = arith.constant 0 : index
    %216 = vector.load %arg9[%c0_94, %c0_95] : memref<64x32xf32, #tpu.memory_space<vmem>>, vector<64x32xf32>
    %cst_96 = arith.constant dense<0.000000e+00> : vector<24x32xf32>
    %217 = tpu.matmul %215, %216, %cst_96 {dimension_numbers = #tpu.dot_dimension_numbers<[1], [0], [0], [1], [0, 0, 1, 1], [], []>} : vector<24x64xf32>, vector<64x32xf32>, vector<24x32xf32> -> vector<24x32xf32>
    %c0_97 = arith.constant 0 : index
    %c0_98 = arith.constant 0 : index
    %218 = vector.load %arg10[%c0_97, %c0_98] : memref<1x32xf32, #tpu.memory_space<vmem>>, vector<1x32xf32>
    %219 = vector.broadcast %218 : vector<1x32xf32> to vector<24x32xf32>
    %220 = arith.addf %217, %219 : vector<24x32xf32>
    %221 = arith.addf %220, %208 : vector<24x32xf32>
    %cst_99 = arith.constant dense<0.000000e+00> : vector<24xf32>
    %222 = vector.multi_reduction <add>, %221, %cst_99 [1] : vector<24x32xf32> to vector<24xf32>
    %223 = vector.shape_cast %222 : vector<24xf32> to vector<24x1xf32>
    %cst_100 = arith.constant 3.200000e+01 : f32
    %224 = vector.broadcast %cst_100 : f32 to vector<24x1xf32>
    %225 = arith.divf %223, %224 : vector<24x1xf32>
    %226 = vector.broadcast %225 : vector<24x1xf32> to vector<24x32xf32>
    %227 = arith.subf %221, %226 : vector<24x32xf32>
    %228 = arith.mulf %227, %227 : vector<24x32xf32>
    %cst_101 = arith.constant dense<0.000000e+00> : vector<24xf32>
    %229 = vector.multi_reduction <add>, %228, %cst_101 [1] : vector<24x32xf32> to vector<24xf32>
    %230 = vector.shape_cast %229 : vector<24xf32> to vector<24x1xf32>
    %cst_102 = arith.constant 3.200000e+01 : f32
    %231 = vector.broadcast %cst_102 : f32 to vector<24x1xf32>
    %232 = arith.divf %230, %231 : vector<24x1xf32>
    %233 = vector.broadcast %225 : vector<24x1xf32> to vector<24x32xf32>
    %234 = arith.subf %221, %233 : vector<24x32xf32>
    %cst_103 = arith.constant 9.99999974E-6 : f32
    %235 = vector.broadcast %cst_103 : f32 to vector<24x1xf32>
    %236 = arith.addf %232, %235 : vector<24x1xf32>
    %237 = math.rsqrt %236 : vector<24x1xf32>
    %238 = vector.broadcast %237 : vector<24x1xf32> to vector<24x32xf32>
    %239 = arith.mulf %234, %238 : vector<24x32xf32>
    %c2_104 = arith.constant 2 : index
    %c0_105 = arith.constant 0 : index
    %240 = vector.load %arg11[%c2_104, %c0_105] : memref<4x32xf32, #tpu.memory_space<vmem>>, vector<1x32xf32>
    %241 = vector.broadcast %240 : vector<1x32xf32> to vector<24x32xf32>
    %242 = arith.mulf %239, %241 : vector<24x32xf32>
    %c3 = arith.constant 3 : index
    %c0_106 = arith.constant 0 : index
    %243 = vector.load %arg11[%c3, %c0_106] : memref<4x32xf32, #tpu.memory_space<vmem>>, vector<1x32xf32>
    %244 = vector.broadcast %243 : vector<1x32xf32> to vector<24x32xf32>
    %245 = arith.addf %242, %244 : vector<24x32xf32>
    %246 = vector.broadcast %177 : vector<24x1xf32> to vector<24x32xf32>
    %247 = arith.mulf %245, %246 : vector<24x32xf32>
    %c0_107 = arith.constant 0 : index
    %c0_108 = arith.constant 0 : index
    %248 = vector.load %arg12[%c0_107, %c0_108] : memref<24x32xf32, #tpu.memory_space<vmem>>, vector<24x32xf32>
    tpu.vector_store %arg12[%c0_107, %c0_108], %247 {strides = array<i32>} : memref<24x32xf32, #tpu.memory_space<vmem>>, vector<24x32xf32>,
    return
  }
  func.func @transform_0(%arg0: i32, %arg1: memref<3xi32, #tpu.memory_space<smem>>) -> (i32, i32) {
    %c0_i32 = arith.constant 0 : i32
    %c0_i32_0 = arith.constant 0 : i32
    %c0_i32_1 = arith.constant 0 : i32
    return %c0_i32, %c0_i32_0 : i32, i32
  }
  func.func @transform_1(%arg0: i32, %arg1: memref<3xi32, #tpu.memory_space<smem>>) -> (i32, i32) {
    %c0_i32 = arith.constant 0 : i32
    %c0_i32_0 = arith.constant 0 : i32
    %c0_i32_1 = arith.constant 0 : i32
    return %c0_i32, %c0_i32_0 : i32, i32
  }
  func.func @transform_2(%arg0: i32, %arg1: memref<3xi32, #tpu.memory_space<smem>>) -> (i32, i32) {
    %c0_i32 = arith.constant 0 : i32
    %c0_i32_0 = arith.constant 0 : i32
    %c0_i32_1 = arith.constant 0 : i32
    return %c0_i32, %c0_i32_0 : i32, i32
  }
  func.func @transform_3(%arg0: i32, %arg1: memref<3xi32, #tpu.memory_space<smem>>) -> (i32, i32) {
    %c0_i32 = arith.constant 0 : i32
    %c0_i32_0 = arith.constant 0 : i32
    %c0_i32_1 = arith.constant 0 : i32
    return %c0_i32, %c0_i32_0 : i32, i32
  }
  func.func @transform_4(%arg0: i32, %arg1: memref<3xi32, #tpu.memory_space<smem>>) -> (i32, i32) {
    %c0_i32 = arith.constant 0 : i32
    %c0_i32_0 = arith.constant 0 : i32
    %c0_i32_1 = arith.constant 0 : i32
    return %c0_i32, %c0_i32_0 : i32, i32
  }
  func.func @transform_5(%arg0: i32, %arg1: memref<3xi32, #tpu.memory_space<smem>>) -> (i32, i32) {
    %c0_i32 = arith.constant 0 : i32
    %c0_i32_0 = arith.constant 0 : i32
    %c0_i32_1 = arith.constant 0 : i32
    return %c0_i32, %c0_i32_0 : i32, i32
  }
  func.func @transform_6(%arg0: i32, %arg1: memref<3xi32, #tpu.memory_space<smem>>) -> (i32, i32) {
    %c0_i32 = arith.constant 0 : i32
    %c0_i32_0 = arith.constant 0 : i32
    %c0_i32_1 = arith.constant 0 : i32
    return %c0_i32, %c0_i32_0 : i32, i32
  }
  func.func @transform_7(%arg0: i32, %arg1: memref<3xi32, #tpu.memory_space<smem>>) -> (i32, i32) {
    %c0_i32 = arith.constant 0 : i32
    %c0_i32_0 = arith.constant 0 : i32
    %c0_i32_1 = arith.constant 0 : i32
    return %c0_i32, %c0_i32_0 : i32, i32
  }
  func.func @transform_8(%arg0: i32, %arg1: memref<3xi32, #tpu.memory_space<smem>>) -> (i32, i32) {
    %c0_i32 = arith.constant 0 : i32
    %c0_i32_0 = arith.constant 0 : i32
    %c0_i32_1 = arith.constant 0 : i32
    return %c0_i32, %c0_i32_0 : i32, i32
  }
  func.func @transform_9(%arg0: i32, %arg1: memref<3xi32, #tpu.memory_space<smem>>) -> (i32, i32) {
    %c0_i32 = arith.constant 0 : i32
    %c0_i32_0 = arith.constant 0 : i32
    %c0_i32_1 = arith.constant 0 : i32
    return %c0_i32, %c0_i32_0 : i32, i32
  }
  func.func @transform_10(%arg0: i32, %arg1: memref<3xi32, #tpu.memory_space<smem>>) -> (i32, i32) {
    %c0_i32 = arith.constant 0 : i32
    %c0_i32_0 = arith.constant 0 : i32
    %c0_i32_1 = arith.constant 0 : i32
    return %c0_i32, %c0_i32_0 : i32, i32
  }
}

</mosaic_0001>

<llo_original>
// kernel: tpu_custom_call.1
$region0: #{tpu_custom_call.1}
  #allocation0 [shape = 'u32[]', space=smem, size = 0x4, offset = 0x4, fixed_abs, tag = 'smem constant byte address 0x4 - core index']
  #allocation1 [shape = 'u32[144,128]{1,0:T(1,128)}', space=vmem, size = 0x12000, scoped, tag = 'internal scratch']
  #allocation2 [shape = 'f32[24,32]{1,0:T(8,128)}', space=vmem, size = 0x3000, scoped, tag = 'scratch operand']
  #allocation3 [shape = 'f32[24,1]{1,0:T(8,128)}', space=vmem, size = 0x3000, scoped, tag = 'scratch operand']
  #allocation4 [shape = 's32[1]{0}', space=sflag, size = 0x4, scoped, tag = 'scoped memory for tpu_custom_call.1']
  #allocation5 [shape = 'u8[512]{0}', space=smem, size = 0x200, scoped, tag = 'prefetched SMEM operand 0']
  %s0 = inlined_call_operand.hbm [shape: s32[3], index: 0, kind: input, shape index: {}]
  %s1 = inlined_call_operand.hbm [shape: f32[24,32], index: 1, kind: input, shape index: {}]
  %s2 = inlined_call_operand.vmem [shape: f32[32,96], index: 2, kind: input, shape index: {}]
  %s3 = inlined_call_operand.vmem [shape: f32[1,96], index: 3, kind: input, shape index: {}]
  %s4 = inlined_call_operand.vmem [shape: f32[32,32], index: 4, kind: input, shape index: {}]
  %s5 = inlined_call_operand.vmem [shape: f32[1,32], index: 5, kind: input, shape index: {}]
  %s6 = inlined_call_operand.vmem [shape: f32[32,64], index: 6, kind: input, shape index: {}]
  %s7 = inlined_call_operand.vmem [shape: f32[1,64], index: 7, kind: input, shape index: {}]
  %s8 = inlined_call_operand.vmem [shape: f32[64,32], index: 8, kind: input, shape index: {}]
  %s9 = inlined_call_operand.vmem [shape: f32[1,32], index: 9, kind: input, shape index: {}]
  %s10 = inlined_call_operand.vmem [shape: f32[4,32], index: 10, kind: input, shape index: {}]
  %s11 = inlined_call_operand.hbm [shape: f32[24,32], index: 11, kind: output, shape index: {}]
  %s12 = sld [smem:[#allocation0]]
  $region54: #{tpu_custom_call.1} parent=0
    _
  %s14 = ssub.s32 1, %s12
  %s15 = scalar_select 0, %s14, %s12
  %17 = dma.hbm_to_smem %s0, 16, [#allocation5], [#allocation4]
  %18 = dma.done [#allocation4], 16
  %19 = sfence
  $region1: #{tpu_custom_call.1} parent=0
    #allocation6 [shape = 'u8[12288]{0}', space=vmem, size = 0x3000, scoped, tag = 'input window, operand 1, single buffered']
    #allocation7 [shape = 's32[1]{0}', space=sflag, size = 0x4, scoped, tag = 'scoped memory for tpu_custom_call.1']
    #allocation8 [shape = 's32[1]{0}', space=sflag, size = 0x4, scoped, tag = 'scoped memory for tpu_custom_call.1']
    #allocation9 [shape = 'u8[12288]{0}', space=vmem, size = 0x3000, scoped, tag = 'output window, operand 0, single buffered']
    %20 = vsyncpa [#allocation7], 0
    %21 = vsyncpa [#allocation8], 0
    // Predicated region
    $region2: #{tpu_custom_call.1} parent=1 // pred_check
      _
    $region3: #{tpu_custom_call.1} parent=1 // pred_check_branch
      %23 = sbr.rel (0) target = $region5
    $region4: #{tpu_custom_call.1} parent=1 // pred_region
      %s25 = ssub.s32 384, 384
      %26 = vsyncadd [#allocation7], %s25
      %s27 = sshll.u32 [#allocation6], 4
      %s28 = int_to_ptr.vmem [resolvable:$true] %s27
      %33 = dma.hbm_to_vmem [thread:$0]  %s1, 384, %s28, [#allocation7], 128, 128, 8
    $region5: #{tpu_custom_call.1} parent=1 // pred_fallthru
      _
    // Predicated region
    $region6: #{tpu_custom_call.1} parent=1 // pred_check
      _
    $region7: #{tpu_custom_call.1} parent=1 // pred_check_branch
      %35 = sbr.rel (0) target = $region9
    $region8: #{tpu_custom_call.1} parent=1 // pred_region
      _
    $region9: #{tpu_custom_call.1} parent=1 // pred_fallthru
      _
    // Predicated region
    $region10: #{tpu_custom_call.1} parent=1 // pred_check
      _
    $region11: #{tpu_custom_call.1} parent=1 // pred_check_branch
      %37 = sbr.rel (0) target = $region13
    $region12: #{tpu_custom_call.1} parent=1 // pred_region
      _
    $region13: #{tpu_custom_call.1} parent=1 // pred_fallthru
      _
    // Predicated region
    $region14: #{tpu_custom_call.1} parent=1 // pred_check
      _
    $region15: #{tpu_custom_call.1} parent=1 // pred_check_branch
      %39 = sbr.rel (0) target = $region17
    $region16: #{tpu_custom_call.1} parent=1 // pred_region
      _
    $region17: #{tpu_custom_call.1} parent=1 // pred_fallthru
      _
    // Predicated region
    $region18: #{tpu_custom_call.1} parent=1 // pred_check
      _
    $region19: #{tpu_custom_call.1} parent=1 // pred_check_branch
      %41 = sbr.rel (0) target = $region21
    $region20: #{tpu_custom_call.1} parent=1 // pred_region
      _
    $region21: #{tpu_custom_call.1} parent=1 // pred_fallthru
      _
    // Predicated region
    $region22: #{tpu_custom_call.1} parent=1 // pred_check
      _
    $region23: #{tpu_custom_call.1} parent=1 // pred_check_branch
      %43 = sbr.rel (0) target = $region25
    $region24: #{tpu_custom_call.1} parent=1 // pred_region
      _
    $region25: #{tpu_custom_call.1} parent=1 // pred_fallthru
      _
    // Predicated region
    $region26: #{tpu_custom_call.1} parent=1 // pred_check
      _
    $region27: #{tpu_custom_call.1} parent=1 // pred_check_branch
      %45 = sbr.rel (0) target = $region29
    $region28: #{tpu_custom_call.1} parent=1 // pred_region
      _
    $region29: #{tpu_custom_call.1} parent=1 // pred_fallthru
      _
    // Predicated region
    $region30: #{tpu_custom_call.1} parent=1 // pred_check
      _
    $region31: #{tpu_custom_call.1} parent=1 // pred_check_branch
      %47 = sbr.rel (0) target = $region33
    $region32: #{tpu_custom_call.1} parent=1 // pred_region
      _
    $region33: #{tpu_custom_call.1} parent=1 // pred_fallthru
      _
    // Predicated region
    $region34: #{tpu_custom_call.1} parent=1 // pred_check
      _
    $region35: #{tpu_custom_call.1} parent=1 // pred_check_branch
      %49 = sbr.rel (0) target = $region37
    $region36: #{tpu_custom_call.1} parent=1 // pred_region
      _
    $region37: #{tpu_custom_call.1} parent=1 // pred_fallthru
      _
    // Predicated region
    $region38: #{tpu_custom_call.1} parent=1 // pred_check
      _
    $region39: #{tpu_custom_call.1} parent=1 // pred_check_branch
      %51 = sbr.rel (0) target = $region41
    $region40: #{tpu_custom_call.1} parent=1 // pred_region
      _
    $region41: #{tpu_custom_call.1} parent=1 // pred_fallthru
      _
    // Predicated region
    $region42: #{tpu_custom_call.1} parent=1 // pred_check
      _
    $region43: #{tpu_custom_call.1} parent=1 // pred_check_branch
      %53 = sbr.rel (0) target = $region45
    $region44: #{tpu_custom_call.1} parent=1 // pred_region
      %54 = dma.done [#allocation7], 384
    $region45: #{tpu_custom_call.1} parent=1 // pred_fallthru
      _
    %v55 = vld [vmem:[#allocation6] sm:$0xff]
    %v56 = vld [vmem:[#allocation6 + $0x8] sm:$0xff]
    %v57 = vld [vmem:[#allocation6 + $0x10] sm:$0xff]
    %v58 = vld [vmem:[%s2] sm:$0xff]
    %v59 = vld [vmem:[%s2 + $0x8] sm:$0xff]
    %v60 = vld [vmem:[%s2 + $0x10] sm:$0xff]
    %v61 = vld [vmem:[%s2 + $0x18] sm:$0xff]
    %v62 = vld [vmem:[%s3] sm:$0x1]
    %v64 = vlaneseq
    %v65 = vshrl.u32 %v64, 7
    %v66 = vsub.s32 0, %v65
    %v67 = vrot.slane %v62, %v66
    %vm69 = vcmask 261120
    %v71 = vsel %vm69, %v55, 0
    %v74 = vsel %vm69, %v56, 0
    %v77 = vsel %vm69, %v57, 0
    %79 = vmatprep.subr.mxu0 0.0
    %80 = vmatpush1.msra.mxu0 %v58
    %81 = vmatprep.subr.mxu0 0.0
    %82 = vmatpush1.msra.mxu0 %v59
    %83 = vmatprep.subr.mxu0 0.0
    %84 = vmatpush1.msra.mxu0 %v60
    %85 = vmatprep.subr.mxu0 0.0
    %86 = vmatpush1.msra.mxu0 %v61
    %87 = vmatprep.subr.mxu0 0.0
    %88 = vmatpush1.msra.mxu0 0.0
    %89 = vmatprep.subr.mxu0 0.0
    %90 = vmatpush1.msra.mxu0 0.0
    %91 = vmatprep.subr.mxu0 0.0
    %92 = vmatpush1.msra.mxu0 0.0
    %93 = vmatprep.subr.mxu0 0.0
    %94 = vmatpush1.msra.mxu0 0.0
    %95 = vmatprep.subr.mxu0 0.0
    %96 = vmatpush1.msra.mxu0 0.0
    %97 = vmatprep.subr.mxu0 0.0
    %98 = vmatpush1.msra.mxu0 0.0
    %99 = vmatprep.subr.mxu0 0.0
    %100 = vmatpush1.msra.mxu0 0.0
    %101 = vmatprep.subr.mxu0 0.0
    %102 = vmatpush1.msra.mxu0 0.0
    %103 = vmatprep.subr.mxu0 0.0
    %104 = vmatpush1.msra.mxu0 0.0
    %105 = vmatprep.subr.mxu0 0.0
    %106 = vmatpush1.msra.mxu0 0.0
    %107 = vmatprep.subr.mxu0 0.0
    %108 = vmatpush1.msra.mxu0 0.0
    %109 = vmatprep.subr.mxu0 0.0
    %110 = vmatpush1.msra.mxu0 0.0
    %111 = vmatprep.subr.mxu0 0.0
    %112 = vmatpush1.msra.mxu0 0.0
    %113 = vmatprep.subr.mxu0 0.0
    %114 = vmatpush1.msra.mxu0 0.0
    %115 = vmatprep.subr.mxu0 0.0
    %116 = vmatpush1.msra.mxu0 0.0
    %117 = vmatprep.subr.mxu0 0.0
    %118 = vmatpush1.msra.mxu0 0.0
    %119 = vmatprep.subr.mxu0 0.0
    %120 = vmatpush1.msra.mxu0 0.0
    %121 = vmatprep.subr.mxu0 0.0
    %122 = vmatpush1.msra.mxu0 0.0
    %123 = vmatprep.subr.mxu0 0.0
    %124 = vmatpush1.msra.mxu0 0.0
    %125 = vmatprep.subr.mxu0 0.0
    %126 = vmatpush1.msra.mxu0 0.0
    %127 = vmatprep.subr.mxu0 0.0
    %128 = vmatpush1.msra.mxu0 0.0
    %129 = vmatprep.subr.mxu0 0.0
    %130 = vmatpush1.msra.mxu0 0.0
    %131 = vmatprep.subr.mxu0 0.0
    %132 = vmatpush1.msra.mxu0 0.0
    %133 = vmatprep.subr.mxu0 0.0
    %134 = vmatpush1.msra.mxu0 0.0
    %135 = vmatprep.subr.mxu0 0.0
    %136 = vmatpush1.msra.mxu0 0.0
    %137 = vmatprep.subr.mxu0 0.0
    %138 = vmatpush1.msra.mxu0 0.0
    %139 = vmatprep.subr.mxu0 0.0
    %140 = vmatpush1.msra.mxu0 0.0
    %141 = vmatprep.subr.mxu0 0.0
    %142 = vmatpush1.msra.mxu0 0.0
    %143 = vmatprep.mubr.f32.mxu0 0.0
    %144 = vmatmul.mubr.f32.gmra.mrb[0].mxu0 %v71
    %v145 = vpop.f32.mrb[0].mxu0
    %v146 = vadd.f32 %v67, %v145
    %v147 = vpop.f32.mrb[0].mxu0
    %148 = vmatprep.mubr.f32.mxu0 0.0
    %149 = vmatmul.mubr.f32.gmra.mrb[0].mxu0 %v74
    %v150 = vpop.f32.mrb[0].mxu0
    %v151 = vadd.f32 %v67, %v150
    %v152 = vpop.f32.mrb[0].mxu0
    %153 = vmatprep.mubr.f32.mxu0 0.0
    %154 = vmatmul.mubr.f32.gmra.mrb[0].mxu0 %v77
    %v155 = vpop.f32.mrb[0].mxu0
    %v156 = vadd.f32 %v67, %v155
    %v157 = vpop.f32.mrb[0].mxu0
    %158 = vdwg.mxu0
    %s159 = sld [smem:[#allocation5]]
    %v160 = vlaneseq
    %v161 = vand.u32 %v160, 127
    %v162 = vstv %s159
    %vm163 = vcmp.ge.s32.totalorder %v161, %v162
    %v164 = vsel %vm163, -1e+30, 0.0
    %v165 = vlaneseq
    %v166 = vshrl.u32 %v165, 7
    %vm167 = vcmp.lt.s32.totalorder %v166, %v162
    %v168 = vsel %vm167, 1, 0
    %v169 = vcvt.s32.f32 %v168
    %vm170 = vcmask 7168
    %171 = vst.msk [vmem:[#allocation3] sm:$0xff] %vm170, %v169
    %173 = vrot.lane.b32.xlu0 %v146, 96
    %v174 = vpop.permute.xlu0 %173
    %vm175 = vcmask 130048
    %v176 = vsel %vm175, %v146, 0
    %v178 = vsel %vm175, %v174, 0
    %180 = vmatprep.subr.mxu0 0.0
    %181 = vmatpush1.xpose.msra.mxu0 %v178
    %182 = vmatprep.subr.mxu0 0.0
    %183 = vmatpush1.xpose.msra.mxu0 0.0
    %184 = vmatprep.subr.mxu0 0.0
    %185 = vmatpush1.xpose.msra.mxu0 0.0
    %186 = vmatprep.subr.mxu0 0.0
    %187 = vmatpush1.xpose.msra.mxu0 0.0
    %188 = vmatprep.subr.mxu0 0.0
    %189 = vmatpush1.xpose.msra.mxu0 0.0
    %190 = vmatprep.subr.mxu0 0.0
    %191 = vmatpush1.xpose.msra.mxu0 0.0
    %192 = vmatprep.subr.mxu0 0.0
    %193 = vmatpush1.xpose.msra.mxu0 0.0
    %194 = vmatprep.subr.mxu0 0.0
    %195 = vmatpush1.xpose.msra.mxu0 0.0
    %196 = vmatprep.subr.mxu0 0.0
    %197 = vmatpush1.xpose.msra.mxu0 0.0
    %198 = vmatprep.subr.mxu0 0.0
    %199 = vmatpush1.xpose.msra.mxu0 0.0
    %200 = vmatprep.subr.mxu0 0.0
    %201 = vmatpush1.xpose.msra.mxu0 0.0
    %202 = vmatprep.subr.mxu0 0.0
    %203 = vmatpush1.xpose.msra.mxu0 0.0
    %204 = vmatprep.subr.mxu0 0.0
    %205 = vmatpush1.xpose.msra.mxu0 0.0
    %206 = vmatprep.subr.mxu0 0.0
    %207 = vmatpush1.xpose.msra.mxu0 0.0
    %208 = vmatprep.subr.mxu0 0.0
    %209 = vmatpush1.xpose.msra.mxu0 0.0
    %210 = vmatprep.subr.mxu0 0.0
    %211 = vmatpush1.xpose.msra.mxu0 0.0
    %212 = vmatprep.subr.mxu0 0.0
    %213 = vmatpush1.xpose.msra.mxu0 0.0
    %214 = vmatprep.subr.mxu0 0.0
    %215 = vmatpush1.xpose.msra.mxu0 0.0
    %216 = vmatprep.subr.mxu0 0.0
    %217 = vmatpush1.xpose.msra.mxu0 0.0
    %218 = vmatprep.subr.mxu0 0.0
    %219 = vmatpush1.xpose.msra.mxu0 0.0
    %220 = vmatprep.subr.mxu0 0.0
    %221 = vmatpush1.xpose.msra.mxu0 0.0
    %222 = vmatprep.subr.mxu0 0.0
    %223 = vmatpush1.xpose.msra.mxu0 0.0
    %224 = vmatprep.subr.mxu0 0.0
    %225 = vmatpush1.xpose.msra.mxu0 0.0
    %226 = vmatprep.subr.mxu0 0.0
    %227 = vmatpush1.xpose.msra.mxu0 0.0
    %228 = vmatprep.subr.mxu0 0.0
    %229 = vmatpush1.xpose.msra.mxu0 0.0
    %230 = vmatprep.subr.mxu0 0.0
    %231 = vmatpush1.xpose.msra.mxu0 0.0
    %232 = vmatprep.subr.mxu0 0.0
    %233 = vmatpush1.xpose.msra.mxu0 0.0
    %234 = vmatprep.subr.mxu0 0.0
    %235 = vmatpush1.xpose.msra.mxu0 0.0
    %236 = vmatprep.subr.mxu0 0.0
    %237 = vmatpush1.xpose.msra.mxu0 0.0
    %238 = vmatprep.subr.mxu0 0.0
    %239 = vmatpush1.xpose.msra.mxu0 0.0
    %240 = vmatprep.subr.mxu0 0.0
    %241 = vmatpush1.xpose.msra.mxu0 0.0
    %242 = vmatprep.subr.mxu0 0.0
    %243 = vmatpush1.xpose.msra.mxu0 0.0
    %244 = vmatprep.mubr.f32.mxu0 0.0
    %245 = vmatmul.mubr.f32.gmra.mrb[0].mxu0 %v176
    %v246 = vpop.f32.mrb[0].mxu0
    %v247 = vadd.f32 0.0, %v246
    %v248 = vpop.f32.mrb[0].mxu0
    %249 = vdwg.mxu0
    %v250 = vmul.f32 %v247, 0.25
    %v251 = vadd.f32 %v250, %v164
    %vm252 = vcmask 64512
    %v253 = vsel %vm252, %v251, -inf
    %254 = vmax.xlane.f32.xlu0 %v253
    %v255 = vpop.xlane.xlu0 %254
    %v256 = vsub.f32 %v251, %v255
    %v257 = vmul.f32 %v256, 1.442695
    %v258 = vpow.pop %v257
    %v259 = vsel %vm252, %v258, 0.0
    %260 = vadd.xlane.f32.xlu0 %v259
    %v261 = vpop.xlane.xlu0 %260
    %v262 = vrcp.pop %v261
    %v263 = vmul.f32 %v258, %v262
    %264 = vrot.lane.b32.xlu0 %v146, 64
    %v265 = vpop.permute.xlu0 %264
    %v268 = vsel %vm252, %v263, 0
    %270 = vmatprep.subr.mxu0 0.0
    %271 = vmatpush1.msra.mxu0 %v265
    %272 = vmatprep.subr.mxu0 0.0
    %273 = vmatpush1.msra.mxu0 0.0
    %274 = vmatprep.subr.mxu0 0.0
    %275 = vmatpush1.msra.mxu0 0.0
    %276 = vmatprep.subr.mxu0 0.0
    %277 = vmatpush1.msra.mxu0 0.0
    %278 = vmatprep.subr.mxu0 0.0
    %279 = vmatpush1.msra.mxu0 0.0
    %280 = vmatprep.subr.mxu0 0.0
    %281 = vmatpush1.msra.mxu0 0.0
    %282 = vmatprep.subr.mxu0 0.0
    %283 = vmatpush1.msra.mxu0 0.0
    %284 = vmatprep.subr.mxu0 0.0
    %285 = vmatpush1.msra.mxu0 0.0
    %286 = vmatprep.subr.mxu0 0.0
    %287 = vmatpush1.msra.mxu0 0.0
    %288 = vmatprep.subr.mxu0 0.0
    %289 = vmatpush1.msra.mxu0 0.0
    %290 = vmatprep.subr.mxu0 0.0
    %291 = vmatpush1.msra.mxu0 0.0
    %292 = vmatprep.subr.mxu0 0.0
    %293 = vmatpush1.msra.mxu0 0.0
    %294 = vmatprep.subr.mxu0 0.0
    %295 = vmatpush1.msra.mxu0 0.0
    %296 = vmatprep.subr.mxu0 0.0
    %297 = vmatpush1.msra.mxu0 0.0
    %298 = vmatprep.subr.mxu0 0.0
    %299 = vmatpush1.msra.mxu0 0.0
    %300 = vmatprep.subr.mxu0 0.0
    %301 = vmatpush1.msra.mxu0 0.0
    %302 = vmatprep.subr.mxu0 0.0
    %303 = vmatpush1.msra.mxu0 0.0
    %304 = vmatprep.subr.mxu0 0.0
    %305 = vmatpush1.msra.mxu0 0.0
    %306 = vmatprep.subr.mxu0 0.0
    %307 = vmatpush1.msra.mxu0 0.0
    %308 = vmatprep.subr.mxu0 0.0
    %309 = vmatpush1.msra.mxu0 0.0
    %310 = vmatprep.subr.mxu0 0.0
    %311 = vmatpush1.msra.mxu0 0.0
    %312 = vmatprep.subr.mxu0 0.0
    %313 = vmatpush1.msra.mxu0 0.0
    %314 = vmatprep.subr.mxu0 0.0
    %315 = vmatpush1.msra.mxu0 0.0
    %316 = vmatprep.subr.mxu0 0.0
    %317 = vmatpush1.msra.mxu0 0.0
    %318 = vmatprep.subr.mxu0 0.0
    %319 = vmatpush1.msra.mxu0 0.0
    %320 = vmatprep.subr.mxu0 0.0
    %321 = vmatpush1.msra.mxu0 0.0
    %322 = vmatprep.subr.mxu0 0.0
    %323 = vmatpush1.msra.mxu0 0.0
    %324 = vmatprep.subr.mxu0 0.0
    %325 = vmatpush1.msra.mxu0 0.0
    %326 = vmatprep.subr.mxu0 0.0
    %327 = vmatpush1.msra.mxu0 0.0
    %328 = vmatprep.subr.mxu0 0.0
    %329 = vmatpush1.msra.mxu0 0.0
    %330 = vmatprep.subr.mxu0 0.0
    %331 = vmatpush1.msra.mxu0 0.0
    %332 = vmatprep.subr.mxu0 0.0
    %333 = vmatpush1.msra.mxu0 0.0
    %334 = vmatprep.mubr.f32.mxu0 0.0
    %335 = vmatmul.mubr.f32.gmra.mrb[0].mxu0 %v268
    %v336 = vpop.f32.mrb[0].mxu0
    %v337 = vadd.f32 0.0, %v336
    %v338 = vpop.f32.mrb[0].mxu0
    %339 = vdwg.mxu0
    %v340 = vld [vmem:[%s4] sm:$0xff]
    %v341 = vld [vmem:[%s4 + $0x8] sm:$0xff]
    %342 = vrot.lane.b32.xlu0 %v146, 112
    %v343 = vpop.permute.xlu0 %342
    %344 = vrot.lane.b32.xlu0 %v146, 80
    %v345 = vpop.permute.xlu0 %344
    %v346 = vsel %vm175, %v343, 0
    %v348 = vsel %vm175, %v345, 0
    %350 = vmatprep.subr.mxu0 0.0
    %351 = vmatpush1.xpose.msra.mxu0 %v348
    %352 = vmatprep.subr.mxu0 0.0
    %353 = vmatpush1.xpose.msra.mxu0 0.0
    %354 = vmatprep.subr.mxu0 0.0
    %355 = vmatpush1.xpose.msra.mxu0 0.0
    %356 = vmatprep.subr.mxu0 0.0
    %357 = vmatpush1.xpose.msra.mxu0 0.0
    %358 = vmatprep.subr.mxu0 0.0
    %359 = vmatpush1.xpose.msra.mxu0 0.0
    %360 = vmatprep.subr.mxu0 0.0
    %361 = vmatpush1.xpose.msra.mxu0 0.0
    %362 = vmatprep.subr.mxu0 0.0
    %363 = vmatpush1.xpose.msra.mxu0 0.0
    %364 = vmatprep.subr.mxu0 0.0
    %365 = vmatpush1.xpose.msra.mxu0 0.0
    %366 = vmatprep.subr.mxu0 0.0
    %367 = vmatpush1.xpose.msra.mxu0 0.0
    %368 = vmatprep.subr.mxu0 0.0
    %369 = vmatpush1.xpose.msra.mxu0 0.0
    %370 = vmatprep.subr.mxu0 0.0
    %371 = vmatpush1.xpose.msra.mxu0 0.0
    %372 = vmatprep.subr.mxu0 0.0
    %373 = vmatpush1.xpose.msra.mxu0 0.0
    %374 = vmatprep.subr.mxu0 0.0
    %375 = vmatpush1.xpose.msra.mxu0 0.0
    %376 = vmatprep.subr.mxu0 0.0
    %377 = vmatpush1.xpose.msra.mxu0 0.0
    %378 = vmatprep.subr.mxu0 0.0
    %379 = vmatpush1.xpose.msra.mxu0 0.0
    %380 = vmatprep.subr.mxu0 0.0
    %381 = vmatpush1.xpose.msra.mxu0 0.0
    %382 = vmatprep.subr.mxu0 0.0
    %383 = vmatpush1.xpose.msra.mxu0 0.0
    %384 = vmatprep.subr.mxu0 0.0
    %385 = vmatpush1.xpose.msra.mxu0 0.0
    %386 = vmatprep.subr.mxu0 0.0
    %387 = vmatpush1.xpose.msra.mxu0 0.0
    %388 = vmatprep.subr.mxu0 0.0
    %389 = vmatpush1.xpose.msra.mxu0 0.0
    %390 = vmatprep.subr.mxu0 0.0
    %391 = vmatpush1.xpose.msra.mxu0 0.0
    %392 = vmatprep.subr.mxu0 0.0
    %393 = vmatpush1.xpose.msra.mxu0 0.0
    %394 = vmatprep.subr.mxu0 0.0
    %395 = vmatpush1.xpose.msra.mxu0 0.0
    %396 = vmatprep.subr.mxu0 0.0
    %397 = vmatpush1.xpose.msra.mxu0 0.0
    %398 = vmatprep.subr.mxu0 0.0
    %399 = vmatpush1.xpose.msra.mxu0 0.0
    %400 = vmatprep.subr.mxu0 0.0
    %401 = vmatpush1.xpose.msra.mxu0 0.0
    %402 = vmatprep.subr.mxu0 0.0
    %403 = vmatpush1.xpose.msra.mxu0 0.0
    %404 = vmatprep.subr.mxu0 0.0
    %405 = vmatpush1.xpose.msra.mxu0 0.0
    %406 = vmatprep.subr.mxu0 0.0
    %407 = vmatpush1.xpose.msra.mxu0 0.0
    %408 = vmatprep.subr.mxu0 0.0
    %409 = vmatpush1.xpose.msra.mxu0 0.0
    %410 = vmatprep.subr.mxu0 0.0
    %411 = vmatpush1.xpose.msra.mxu0 0.0
    %412 = vmatprep.subr.mxu0 0.0
    %413 = vmatpush1.xpose.msra.mxu0 0.0
    %414 = vmatprep.mubr.f32.mxu0 0.0
    %415 = vmatmul.mubr.f32.gmra.mrb[0].mxu0 %v346
    %v416 = vpop.f32.mrb[0].mxu0
    %v417 = vadd.f32 0.0, %v416
    %v418 = vpop.f32.mrb[0].mxu0
    %419 = vdwg.mxu0
    %v420 = vmul.f32 %v417, 0.25
    %v421 = vadd.f32 %v420, %v164
    %v422 = vsel %vm252, %v421, -inf
    %423 = vmax.xlane.f32.xlu0 %v422
    %v424 = vpop.xlane.xlu0 %423
    %v425 = vsub.f32 %v421, %v424
    %v426 = vmul.f32 %v425, 1.442695
    %v427 = vpow.pop %v426
    %v428 = vsel %vm252, %v427, 0.0
    %429 = vadd.xlane.f32.xlu0 %v428
    %v430 = vpop.xlane.xlu0 %429
    %v431 = vrcp.pop %v430
    %v432 = vmul.f32 %v427, %v431
    %433 = vrot.lane.b32.xlu0 %v146, 48
    %v434 = vpop.permute.xlu0 %433
    %v437 = vsel %vm252, %v432, 0
    %439 = vmatprep.subr.mxu0 0.0
    %440 = vmatpush1.msra.mxu0 %v434
    %441 = vmatprep.subr.mxu0 0.0
    %442 = vmatpush1.msra.mxu0 0.0
    %443 = vmatprep.subr.mxu0 0.0
    %444 = vmatpush1.msra.mxu0 0.0
    %445 = vmatprep.subr.mxu0 0.0
    %446 = vmatpush1.msra.mxu0 0.0
    %447 = vmatprep.subr.mxu0 0.0
    %448 = vmatpush1.msra.mxu0 0.0
    %449 = vmatprep.subr.mxu0 0.0
    %450 = vmatpush1.msra.mxu0 0.0
    %451 = vmatprep.subr.mxu0 0.0
    %452 = vmatpush1.msra.mxu0 0.0
    %453 = vmatprep.subr.mxu0 0.0
    %454 = vmatpush1.msra.mxu0 0.0
    %455 = vmatprep.subr.mxu0 0.0
    %456 = vmatpush1.msra.mxu0 0.0
    %457 = vmatprep.subr.mxu0 0.0
    %458 = vmatpush1.msra.mxu0 0.0
    %459 = vmatprep.subr.mxu0 0.0
    %460 = vmatpush1.msra.mxu0 0.0
    %461 = vmatprep.subr.mxu0 0.0
    %462 = vmatpush1.msra.mxu0 0.0
    %463 = vmatprep.subr.mxu0 0.0
    %464 = vmatpush1.msra.mxu0 0.0
    %465 = vmatprep.subr.mxu0 0.0
    %466 = vmatpush1.msra.mxu0 0.0
    %467 = vmatprep.subr.mxu0 0.0
    %468 = vmatpush1.msra.mxu0 0.0
    %469 = vmatprep.subr.mxu0 0.0
    %470 = vmatpush1.msra.mxu0 0.0
    %471 = vmatprep.subr.mxu0 0.0
    %472 = vmatpush1.msra.mxu0 0.0
    %473 = vmatprep.subr.mxu0 0.0
    %474 = vmatpush1.msra.mxu0 0.0
    %475 = vmatprep.subr.mxu0 0.0
    %476 = vmatpush1.msra.mxu0 0.0
    %477 = vmatprep.subr.mxu0 0.0
    %478 = vmatpush1.msra.mxu0 0.0
    %479 = vmatprep.subr.mxu0 0.0
    %480 = vmatpush1.msra.mxu0 0.0
    %481 = vmatprep.subr.mxu0 0.0
    %482 = vmatpush1.msra.mxu0 0.0
    %483 = vmatprep.subr.mxu0 0.0
    %484 = vmatpush1.msra.mxu0 0.0
    %485 = vmatprep.subr.mxu0 0.0
    %486 = vmatpush1.msra.mxu0 0.0
    %487 = vmatprep.subr.mxu0 0.0
    %488 = vmatpush1.msra.mxu0 0.0
    %489 = vmatprep.subr.mxu0 0.0
    %490 = vmatpush1.msra.mxu0 0.0
    %491 = vmatprep.subr.mxu0 0.0
    %492 = vmatpush1.msra.mxu0 0.0
    %493 = vmatprep.subr.mxu0 0.0
    %494 = vmatpush1.msra.mxu0 0.0
    %495 = vmatprep.subr.mxu0 0.0
    %496 = vmatpush1.msra.mxu0 0.0
    %497 = vmatprep.subr.mxu0 0.0
    %498 = vmatpush1.msra.mxu0 0.0
    %499 = vmatprep.subr.mxu0 0.0
    %500 = vmatpush1.msra.mxu0 0.0
    %501 = vmatprep.subr.mxu0 0.0
    %502 = vmatpush1.msra.mxu0 0.0
    %503 = vmatprep.mubr.f32.mxu0 0.0
    %504 = vmatmul.mubr.f32.gmra.mrb[0].mxu0 %v437
    %v505 = vpop.f32.mrb[0].mxu0
    %v506 = vadd.f32 0.0, %v505
    %v507 = vpop.f32.mrb[0].mxu0
    %508 = vdwg.mxu0
    %v509 = vld [vmem:[%s4 + $0x10] sm:$0xff]
    %v510 = vld [vmem:[%s4 + $0x18] sm:$0xff]
    %v512 = vsel %vm175, %v506, 0
    %514 = vmatprep.subr.mxu0 0.0
    %515 = vmatpush1.msra.mxu0 %v509
    %516 = vmatprep.subr.mxu0 0.0
    %517 = vmatpush1.msra.mxu0 %v510
    %518 = vmatprep.subr.mxu0 0.0
    %519 = vmatpush1.msra.mxu0 0.0
    %520 = vmatprep.subr.mxu0 0.0
    %521 = vmatpush1.msra.mxu0 0.0
    %522 = vmatprep.subr.mxu0 0.0
    %523 = vmatpush1.msra.mxu0 0.0
    %524 = vmatprep.subr.mxu0 0.0
    %525 = vmatpush1.msra.mxu0 0.0
    %526 = vmatprep.subr.mxu0 0.0
    %527 = vmatpush1.msra.mxu0 0.0
    %528 = vmatprep.subr.mxu0 0.0
    %529 = vmatpush1.msra.mxu0 0.0
    %530 = vmatprep.subr.mxu0 0.0
    %531 = vmatpush1.msra.mxu0 0.0
    %532 = vmatprep.subr.mxu0 0.0
    %533 = vmatpush1.msra.mxu0 0.0
    %534 = vmatprep.subr.mxu0 0.0
    %535 = vmatpush1.msra.mxu0 0.0
    %536 = vmatprep.subr.mxu0 0.0
    %537 = vmatpush1.msra.mxu0 0.0
    %538 = vmatprep.subr.mxu0 0.0
    %539 = vmatpush1.msra.mxu0 0.0
    %540 = vmatprep.subr.mxu0 0.0
    %541 = vmatpush1.msra.mxu0 0.0
    %542 = vmatprep.subr.mxu0 0.0
    %543 = vmatpush1.msra.mxu0 0.0
    %544 = vmatprep.subr.mxu0 0.0
    %545 = vmatpush1.msra.mxu0 0.0
    %546 = vmatprep.subr.mxu0 0.0
    %547 = vmatpush1.msra.mxu0 0.0
    %548 = vmatprep.subr.mxu0 0.0
    %549 = vmatpush1.msra.mxu0 0.0
    %550 = vmatprep.subr.mxu0 0.0
    %551 = vmatpush1.msra.mxu0 0.0
    %552 = vmatprep.subr.mxu0 0.0
    %553 = vmatpush1.msra.mxu0 0.0
    %554 = vmatprep.subr.mxu0 0.0
    %555 = vmatpush1.msra.mxu0 0.0
    %556 = vmatprep.subr.mxu0 0.0
    %557 = vmatpush1.msra.mxu0 0.0
    %558 = vmatprep.subr.mxu0 0.0
    %559 = vmatpush1.msra.mxu0 0.0
    %560 = vmatprep.subr.mxu0 0.0
    %561 = vmatpush1.msra.mxu0 0.0
    %562 = vmatprep.subr.mxu0 0.0
    %563 = vmatpush1.msra.mxu0 0.0
    %564 = vmatprep.subr.mxu0 0.0
    %565 = vmatpush1.msra.mxu0 0.0
    %566 = vmatprep.subr.mxu0 0.0
    %567 = vmatpush1.msra.mxu0 0.0
    %568 = vmatprep.subr.mxu0 0.0
    %569 = vmatpush1.msra.mxu0 0.0
    %570 = vmatprep.subr.mxu0 0.0
    %571 = vmatpush1.msra.mxu0 0.0
    %572 = vmatprep.subr.mxu0 0.0
    %573 = vmatpush1.msra.mxu0 0.0
    %574 = vmatprep.subr.mxu0 0.0
    %575 = vmatpush1.msra.mxu0 0.0
    %576 = vmatprep.subr.mxu0 0.0
    %577 = vmatpush1.msra.mxu0 0.0
    %578 = vmatprep.mubr.f32.mxu0 0.0
    %579 = vmatmul.mubr.f32.gmra.mrb[0].mxu0 %v512
    %v580 = vpop.f32.mrb[0].mxu0
    %v581 = vadd.f32 0.0, %v580
    %v582 = vpop.f32.mrb[0].mxu0
    %583 = vdwg.mxu0
    %v585 = vsel %vm175, %v337, 0
    %587 = vmatprep.subr.mxu0 0.0
    %588 = vmatpush1.msra.mxu0 %v340
    %589 = vmatprep.subr.mxu0 0.0
    %590 = vmatpush1.msra.mxu0 %v341
    %591 = vmatprep.subr.mxu0 0.0
    %592 = vmatpush1.msra.mxu0 0.0
    %593 = vmatprep.subr.mxu0 0.0
    %594 = vmatpush1.msra.mxu0 0.0
    %595 = vmatprep.subr.mxu0 0.0
    %596 = vmatpush1.msra.mxu0 0.0
    %597 = vmatprep.subr.mxu0 0.0
    %598 = vmatpush1.msra.mxu0 0.0
    %599 = vmatprep.subr.mxu0 0.0
    %600 = vmatpush1.msra.mxu0 0.0
    %601 = vmatprep.subr.mxu0 0.0
    %602 = vmatpush1.msra.mxu0 0.0
    %603 = vmatprep.subr.mxu0 0.0
    %604 = vmatpush1.msra.mxu0 0.0
    %605 = vmatprep.subr.mxu0 0.0
    %606 = vmatpush1.msra.mxu0 0.0
    %607 = vmatprep.subr.mxu0 0.0
    %608 = vmatpush1.msra.mxu0 0.0
    %609 = vmatprep.subr.mxu0 0.0
    %610 = vmatpush1.msra.mxu0 0.0
    %611 = vmatprep.subr.mxu0 0.0
    %612 = vmatpush1.msra.mxu0 0.0
    %613 = vmatprep.subr.mxu0 0.0
    %614 = vmatpush1.msra.mxu0 0.0
    %615 = vmatprep.subr.mxu0 0.0
    %616 = vmatpush1.msra.mxu0 0.0
    %617 = vmatprep.subr.mxu0 0.0
    %618 = vmatpush1.msra.mxu0 0.0
    %619 = vmatprep.subr.mxu0 0.0
    %620 = vmatpush1.msra.mxu0 0.0
    %621 = vmatprep.subr.mxu0 0.0
    %622 = vmatpush1.msra.mxu0 0.0
    %623 = vmatprep.subr.mxu0 0.0
    %624 = vmatpush1.msra.mxu0 0.0
    %625 = vmatprep.subr.mxu0 0.0
    %626 = vmatpush1.msra.mxu0 0.0
    %627 = vmatprep.subr.mxu0 0.0
    %628 = vmatpush1.msra.mxu0 0.0
    %629 = vmatprep.subr.mxu0 0.0
    %630 = vmatpush1.msra.mxu0 0.0
    %631 = vmatprep.subr.mxu0 0.0
    %632 = vmatpush1.msra.mxu0 0.0
    %633 = vmatprep.subr.mxu0 0.0
    %634 = vmatpush1.msra.mxu0 0.0
    %635 = vmatprep.subr.mxu0 0.0
    %636 = vmatpush1.msra.mxu0 0.0
    %637 = vmatprep.subr.mxu0 0.0
    %638 = vmatpush1.msra.mxu0 0.0
    %639 = vmatprep.subr.mxu0 0.0
    %640 = vmatpush1.msra.mxu0 0.0
    %641 = vmatprep.subr.mxu0 0.0
    %642 = vmatpush1.msra.mxu0 0.0
    %643 = vmatprep.subr.mxu0 0.0
    %644 = vmatpush1.msra.mxu0 0.0
    %645 = vmatprep.subr.mxu0 0.0
    %646 = vmatpush1.msra.mxu0 0.0
    %647 = vmatprep.subr.mxu0 0.0
    %648 = vmatpush1.msra.mxu0 0.0
    %649 = vmatprep.subr.mxu0 0.0
    %650 = vmatpush1.msra.mxu0 0.0
    %651 = vmatprep.mubr.f32.mxu0 0.0
    %652 = vmatmul.mubr.f32.gmra.mrb[0].mxu0 %v585
    %v653 = vpop.f32.mrb[0].mxu0
    %v654 = vadd.f32 %v581, %v653
    %v655 = vpop.f32.mrb[0].mxu0
    %656 = vdwg.mxu0
    %657 = vst.msk [vmem:[#allocation2] sm:$0xff] %vm69, %v654
    %s658 = sld [smem:[#allocation5 + $0x1]]
    %v659 = vstv %s658
    %vm660 = vcmp.ge.s32.totalorder %v161, %v659
    %v661 = vsel %vm660, -1e+30, 0.0
    %vm662 = vcmp.lt.s32.totalorder %v166, %v659
    %v663 = vsel %vm662, 1, 0
    %v664 = vcvt.s32.f32 %v663
    %665 = vst.msk [vmem:[#allocation3 + $0x8] sm:$0xff] %vm170, %v664
    %667 = vrot.lane.b32.xlu0 %v151, 96
    %v668 = vpop.permute.xlu0 %667
    %v669 = vsel %vm175, %v151, 0
    %v671 = vsel %vm175, %v668, 0
    %673 = vmatprep.subr.mxu0 0.0
    %674 = vmatpush1.xpose.msra.mxu0 %v671
    %675 = vmatprep.subr.mxu0 0.0
    %676 = vmatpush1.xpose.msra.mxu0 0.0
    %677 = vmatprep.subr.mxu0 0.0
    %678 = vmatpush1.xpose.msra.mxu0 0.0
    %679 = vmatprep.subr.mxu0 0.0
    %680 = vmatpush1.xpose.msra.mxu0 0.0
    %681 = vmatprep.subr.mxu0 0.0
    %682 = vmatpush1.xpose.msra.mxu0 0.0
    %683 = vmatprep.subr.mxu0 0.0
    %684 = vmatpush1.xpose.msra.mxu0 0.0
    %685 = vmatprep.subr.mxu0 0.0
    %686 = vmatpush1.xpose.msra.mxu0 0.0
    %687 = vmatprep.subr.mxu0 0.0
    %688 = vmatpush1.xpose.msra.mxu0 0.0
    %689 = vmatprep.subr.mxu0 0.0
    %690 = vmatpush1.xpose.msra.mxu0 0.0
    %691 = vmatprep.subr.mxu0 0.0
    %692 = vmatpush1.xpose.msra.mxu0 0.0
    %693 = vmatprep.subr.mxu0 0.0
    %694 = vmatpush1.xpose.msra.mxu0 0.0
    %695 = vmatprep.subr.mxu0 0.0
    %696 = vmatpush1.xpose.msra.mxu0 0.0
    %697 = vmatprep.subr.mxu0 0.0
    %698 = vmatpush1.xpose.msra.mxu0 0.0
    %699 = vmatprep.subr.mxu0 0.0
    %700 = vmatpush1.xpose.msra.mxu0 0.0
    %701 = vmatprep.subr.mxu0 0.0
    %702 = vmatpush1.xpose.msra.mxu0 0.0
    %703 = vmatprep.subr.mxu0 0.0
    %704 = vmatpush1.xpose.msra.mxu0 0.0
    %705 = vmatprep.subr.mxu0 0.0
    %706 = vmatpush1.xpose.msra.mxu0 0.0
    %707 = vmatprep.subr.mxu0 0.0
    %708 = vmatpush1.xpose.msra.mxu0 0.0
    %709 = vmatprep.subr.mxu0 0.0
    %710 = vmatpush1.xpose.msra.mxu0 0.0
    %711 = vmatprep.subr.mxu0 0.0
    %712 = vmatpush1.xpose.msra.mxu0 0.0
    %713 = vmatprep.subr.mxu0 0.0
    %714 = vmatpush1.xpose.msra.mxu0 0.0
    %715 = vmatprep.subr.mxu0 0.0
    %716 = vmatpush1.xpose.msra.mxu0 0.0
    %717 = vmatprep.subr.mxu0 0.0
    %718 = vmatpush1.xpose.msra.mxu0 0.0
    %719 = vmatprep.subr.mxu0 0.0
    %720 = vmatpush1.xpose.msra.mxu0 0.0
    %721 = vmatprep.subr.mxu0 0.0
    %722 = vmatpush1.xpose.msra.mxu0 0.0
    %723 = vmatprep.subr.mxu0 0.0
    %724 = vmatpush1.xpose.msra.mxu0 0.0
    %725 = vmatprep.subr.mxu0 0.0
    %726 = vmatpush1.xpose.msra.mxu0 0.0
    %727 = vmatprep.subr.mxu0 0.0
    %728 = vmatpush1.xpose.msra.mxu0 0.0
    %729 = vmatprep.subr.mxu0 0.0
    %730 = vmatpush1.xpose.msra.mxu0 0.0
    %731 = vmatprep.subr.mxu0 0.0
    %732 = vmatpush1.xpose.msra.mxu0 0.0
    %733 = vmatprep.subr.mxu0 0.0
    %734 = vmatpush1.xpose.msra.mxu0 0.0
    %735 = vmatprep.subr.mxu0 0.0
    %736 = vmatpush1.xpose.msra.mxu0 0.0
    %737 = vmatprep.mubr.f32.mxu0 0.0
    %738 = vmatmul.mubr.f32.gmra.mrb[0].mxu0 %v669
    %v739 = vpop.f32.mrb[0].mxu0
    %v740 = vadd.f32 0.0, %v739
    %v741 = vpop.f32.mrb[0].mxu0
    %742 = vdwg.mxu0
    %v743 = vmul.f32 %v740, 0.25
    %v744 = vadd.f32 %v743, %v661
    %v745 = vsel %vm252, %v744, -inf
    %746 = vmax.xlane.f32.xlu0 %v745
    %v747 = vpop.xlane.xlu0 %746
    %v748 = vsub.f32 %v744, %v747
    %v749 = vmul.f32 %v748, 1.442695
    %v750 = vpow.pop %v749
    %v751 = vsel %vm252, %v750, 0.0
    %752 = vadd.xlane.f32.xlu0 %v751
    %v753 = vpop.xlane.xlu0 %752
    %v754 = vrcp.pop %v753
    %v755 = vmul.f32 %v750, %v754
    %756 = vrot.lane.b32.xlu0 %v151, 64
    %v757 = vpop.permute.xlu0 %756
    %v760 = vsel %vm252, %v755, 0
    %762 = vmatprep.subr.mxu0 0.0
    %763 = vmatpush1.msra.mxu0 %v757
    %764 = vmatprep.subr.mxu0 0.0
    %765 = vmatpush1.msra.mxu0 0.0
    %766 = vmatprep.subr.mxu0 0.0
    %767 = vmatpush1.msra.mxu0 0.0
    %768 = vmatprep.subr.mxu0 0.0
    %769 = vmatpush1.msra.mxu0 0.0
    %770 = vmatprep.subr.mxu0 0.0
    %771 = vmatpush1.msra.mxu0 0.0
    %772 = vmatprep.subr.mxu0 0.0
    %773 = vmatpush1.msra.mxu0 0.0
    %774 = vmatprep.subr.mxu0 0.0
    %775 = vmatpush1.msra.mxu0 0.0
    %776 = vmatprep.subr.mxu0 0.0
    %777 = vmatpush1.msra.mxu0 0.0
    %778 = vmatprep.subr.mxu0 0.0
    %779 = vmatpush1.msra.mxu0 0.0
    %780 = vmatprep.subr.mxu0 0.0
    %781 = vmatpush1.msra.mxu0 0.0
    %782 = vmatprep.subr.mxu0 0.0
    %783 = vmatpush1.msra.mxu0 0.0
    %784 = vmatprep.subr.mxu0 0.0
    %785 = vmatpush1.msra.mxu0 0.0
    %786 = vmatprep.subr.mxu0 0.0
    %787 = vmatpush1.msra.mxu0 0.0
    %788 = vmatprep.subr.mxu0 0.0
    %789 = vmatpush1.msra.mxu0 0.0
    %790 = vmatprep.subr.mxu0 0.0
    %791 = vmatpush1.msra.mxu0 0.0
    %792 = vmatprep.subr.mxu0 0.0
    %793 = vmatpush1.msra.mxu0 0.0
    %794 = vmatprep.subr.mxu0 0.0
    %795 = vmatpush1.msra.mxu0 0.0
    %796 = vmatprep.subr.mxu0 0.0
    %797 = vmatpush1.msra.mxu0 0.0
    %798 = vmatprep.subr.mxu0 0.0
    %799 = vmatpush1.msra.mxu0 0.0
    %800 = vmatprep.subr.mxu0 0.0
    %801 = vmatpush1.msra.mxu0 0.0
    %802 = vmatprep.subr.mxu0 0.0
    %803 = vmatpush1.msra.mxu0 0.0
    %804 = vmatprep.subr.mxu0 0.0
    %805 = vmatpush1.msra.mxu0 0.0
    %806 = vmatprep.subr.mxu0 0.0
    %807 = vmatpush1.msra.mxu0 0.0
    %808 = vmatprep.subr.mxu0 0.0
    %809 = vmatpush1.msra.mxu0 0.0
    %810 = vmatprep.subr.mxu0 0.0
    %811 = vmatpush1.msra.mxu0 0.0
    %812 = vmatprep.subr.mxu0 0.0
    %813 = vmatpush1.msra.mxu0 0.0
    %814 = vmatprep.subr.mxu0 0.0
    %815 = vmatpush1.msra.mxu0 0.0
    %816 = vmatprep.subr.mxu0 0.0
    %817 = vmatpush1.msra.mxu0 0.0
    %818 = vmatprep.subr.mxu0 0.0
    %819 = vmatpush1.msra.mxu0 0.0
    %820 = vmatprep.subr.mxu0 0.0
    %821 = vmatpush1.msra.mxu0 0.0
    %822 = vmatprep.subr.mxu0 0.0
    %823 = vmatpush1.msra.mxu0 0.0
    %824 = vmatprep.subr.mxu0 0.0
    %825 = vmatpush1.msra.mxu0 0.0
    %826 = vmatprep.mubr.f32.mxu0 0.0
    %827 = vmatmul.mubr.f32.gmra.mrb[0].mxu0 %v760
    %v828 = vpop.f32.mrb[0].mxu0
    %v829 = vadd.f32 0.0, %v828
    %v830 = vpop.f32.mrb[0].mxu0
    %831 = vdwg.mxu0
    %v832 = vld [vmem:[%s4] sm:$0xff]
    %v833 = vld [vmem:[%s4 + $0x8] sm:$0xff]
    %834 = vrot.lane.b32.xlu0 %v151, 112
    %v835 = vpop.permute.xlu0 %834
    %836 = vrot.lane.b32.xlu0 %v151, 80
    %v837 = vpop.permute.xlu0 %836
    %v838 = vsel %vm175, %v835, 0
    %v840 = vsel %vm175, %v837, 0
    %842 = vmatprep.subr.mxu0 0.0
    %843 = vmatpush1.xpose.msra.mxu0 %v840
    %844 = vmatprep.subr.mxu0 0.0
    %845 = vmatpush1.xpose.msra.mxu0 0.0
    %846 = vmatprep.subr.mxu0 0.0
    %847 = vmatpush1.xpose.msra.mxu0 0.0
    %848 = vmatprep.subr.mxu0 0.0
    %849 = vmatpush1.xpose.msra.mxu0 0.0
    %850 = vmatprep.subr.mxu0 0.0
    %851 = vmatpush1.xpose.msra.mxu0 0.0
    %852 = vmatprep.subr.mxu0 0.0
    %853 = vmatpush1.xpose.msra.mxu0 0.0
    %854 = vmatprep.subr.mxu0 0.0
    %855 = vmatpush1.xpose.msra.mxu0 0.0
    %856 = vmatprep.subr.mxu0 0.0
    %857 = vmatpush1.xpose.msra.mxu0 0.0
    %858 = vmatprep.subr.mxu0 0.0
    %859 = vmatpush1.xpose.msra.mxu0 0.0
    %860 = vmatprep.subr.mxu0 0.0
    %861 = vmatpush1.xpose.msra.mxu0 0.0
    %862 = vmatprep.subr.mxu0 0.0
    %863 = vmatpush1.xpose.msra.mxu0 0.0
    %864 = vmatprep.subr.mxu0 0.0
    %865 = vmatpush1.xpose.msra.mxu0 0.0
    %866 = vmatprep.subr.mxu0 0.0
    %867 = vmatpush1.xpose.msra.mxu0 0.0
    %868 = vmatprep.subr.mxu0 0.0
    %869 = vmatpush1.xpose.msra.mxu0 0.0
    %870 = vmatprep.subr.mxu0 0.0
    %871 = vmatpush1.xpose.msra.mxu0 0.0
    %872 = vmatprep.subr.mxu0 0.0
    %873 = vmatpush1.xpose.msra.mxu0 0.0
    %874 = vmatprep.subr.mxu0 0.0
    %875 = vmatpush1.xpose.msra.mxu0 0.0
    %876 = vmatprep.subr.mxu0 0.0
    %877 = vmatpush1.xpose.msra.mxu0 0.0
    %878 = vmatprep.subr.mxu0 0.0
    %879 = vmatpush1.xpose.msra.mxu0 0.0
    %880 = vmatprep.subr.mxu0 0.0
    %881 = vmatpush1.xpose.msra.mxu0 0.0
    %882 = vmatprep.subr.mxu0 0.0
    %883 = vmatpush1.xpose.msra.mxu0 0.0
    %884 = vmatprep.subr.mxu0 0.0
    %885 = vmatpush1.xpose.msra.mxu0 0.0
    %886 = vmatprep.subr.mxu0 0.0
    %887 = vmatpush1.xpose.msra.mxu0 0.0
    %888 = vmatprep.subr.mxu0 0.0
    %889 = vmatpush1.xpose.msra.mxu0 0.0
    %890 = vmatprep.subr.mxu0 0.0
    %891 = vmatpush1.xpose.msra.mxu0 0.0
    %892 = vmatprep.subr.mxu0 0.0
    %893 = vmatpush1.xpose.msra.mxu0 0.0
    %894 = vmatprep.subr.mxu0 0.0
    %895 = vmatpush1.xpose.msra.mxu0 0.0
    %896 = vmatprep.subr.mxu0 0.0
    %897 = vmatpush1.xpose.msra.mxu0 0.0
    %898 = vmatprep.subr.mxu0 0.0
    %899 = vmatpush1.xpose.msra.mxu0 0.0
    %900 = vmatprep.subr.mxu0 0.0
    %901 = vmatpush1.xpose.msra.mxu0 0.0
    %902 = vmatprep.subr.mxu0 0.0
    %903 = vmatpush1.xpose.msra.mxu0 0.0
    %904 = vmatprep.subr.mxu0 0.0
    %905 = vmatpush1.xpose.msra.mxu0 0.0
    %906 = vmatprep.mubr.f32.mxu0 0.0
    %907 = vmatmul.mubr.f32.gmra.mrb[0].mxu0 %v838
    %v908 = vpop.f32.mrb[0].mxu0
    %v909 = vadd.f32 0.0, %v908
    %v910 = vpop.f32.mrb[0].mxu0
    %911 = vdwg.mxu0
    %v912 = vmul.f32 %v909, 0.25
    %v913 = vadd.f32 %v912, %v661
    %v914 = vsel %vm252, %v913, -inf
    %915 = vmax.xlane.f32.xlu0 %v914
    %v916 = vpop.xlane.xlu0 %915
    %v917 = vsub.f32 %v913, %v916
    %v918 = vmul.f32 %v917, 1.442695
    %v919 = vpow.pop %v918
    %v920 = vsel %vm252, %v919, 0.0
    %921 = vadd.xlane.f32.xlu0 %v920
    %v922 = vpop.xlane.xlu0 %921
    %v923 = vrcp.pop %v922
    %v924 = vmul.f32 %v919, %v923
    %925 = vrot.lane.b32.xlu0 %v151, 48
    %v926 = vpop.permute.xlu0 %925
    %v929 = vsel %vm252, %v924, 0
    %931 = vmatprep.subr.mxu0 0.0
    %932 = vmatpush1.msra.mxu0 %v926
    %933 = vmatprep.subr.mxu0 0.0
    %934 = vmatpush1.msra.mxu0 0.0
    %935 = vmatprep.subr.mxu0 0.0
    %936 = vmatpush1.msra.mxu0 0.0
    %937 = vmatprep.subr.mxu0 0.0
    %938 = vmatpush1.msra.mxu0 0.0
    %939 = vmatprep.subr.mxu0 0.0
    %940 = vmatpush1.msra.mxu0 0.0
    %941 = vmatprep.subr.mxu0 0.0
    %942 = vmatpush1.msra.mxu0 0.0
    %943 = vmatprep.subr.mxu0 0.0
    %944 = vmatpush1.msra.mxu0 0.0
    %945 = vmatprep.subr.mxu0 0.0
    %946 = vmatpush1.msra.mxu0 0.0
    %947 = vmatprep.subr.mxu0 0.0
    %948 = vmatpush1.msra.mxu0 0.0
    %949 = vmatprep.subr.mxu0 0.0
    %950 = vmatpush1.msra.mxu0 0.0
    %951 = vmatprep.subr.mxu0 0.0
    %952 = vmatpush1.msra.mxu0 0.0
    %953 = vmatprep.subr.mxu0 0.0
    %954 = vmatpush1.msra.mxu0 0.0
    %955 = vmatprep.subr.mxu0 0.0
    %956 = vmatpush1.msra.mxu0 0.0
    %957 = vmatprep.subr.mxu0 0.0
    %958 = vmatpush1.msra.mxu0 0.0
    %959 = vmatprep.subr.mxu0 0.0
    %960 = vmatpush1.msra.mxu0 0.0
    %961 = vmatprep.subr.mxu0 0.0
    %962 = vmatpush1.msra.mxu0 0.0
    %963 = vmatprep.subr.mxu0 0.0
    %964 = vmatpush1.msra.mxu0 0.0
    %965 = vmatprep.subr.mxu0 0.0
    %966 = vmatpush1.msra.mxu0 0.0
    %967 = vmatprep.subr.mxu0 0.0
    %968 = vmatpush1.msra.mxu0 0.0
    %969 = vmatprep.subr.mxu0 0.0
    %970 = vmatpush1.msra.mxu0 0.0
    %971 = vmatprep.subr.mxu0 0.0
    %972 = vmatpush1.msra.mxu0 0.0
    %973 = vmatprep.subr.mxu0 0.0
    %974 = vmatpush1.msra.mxu0 0.0
    %975 = vmatprep.subr.mxu0 0.0
    %976 = vmatpush1.msra.mxu0 0.0
    %977 = vmatprep.subr.mxu0 0.0
    %978 = vmatpush1.msra.mxu0 0.0
    %979 = vmatprep.subr.mxu0 0.0
    %980 = vmatpush1.msra.mxu0 0.0
    %981 = vmatprep.subr.mxu0 0.0
    %982 = vmatpush1.msra.mxu0 0.0
    %983 = vmatprep.subr.mxu0 0.0
    %984 = vmatpush1.msra.mxu0 0.0
    %985 = vmatprep.subr.mxu0 0.0
    %986 = vmatpush1.msra.mxu0 0.0
    %987 = vmatprep.subr.mxu0 0.0
    %988 = vmatpush1.msra.mxu0 0.0
    %989 = vmatprep.subr.mxu0 0.0
    %990 = vmatpush1.msra.mxu0 0.0
    %991 = vmatprep.subr.mxu0 0.0
    %992 = vmatpush1.msra.mxu0 0.0
    %993 = vmatprep.subr.mxu0 0.0
    %994 = vmatpush1.msra.mxu0 0.0
    %995 = vmatprep.mubr.f32.mxu0 0.0
    %996 = vmatmul.mubr.f32.gmra.mrb[0].mxu0 %v929
    %v997 = vpop.f32.mrb[0].mxu0
    %v998 = vadd.f32 0.0, %v997
    %v999 = vpop.f32.mrb[0].mxu0
    %1000 = vdwg.mxu0
    %v1001 = vld [vmem:[%s4 + $0x10] sm:$0xff]
    %v1002 = vld [vmem:[%s4 + $0x18] sm:$0xff]
    %v1004 = vsel %vm175, %v998, 0
    %1006 = vmatprep.subr.mxu0 0.0
    %1007 = vmatpush1.msra.mxu0 %v1001
    %1008 = vmatprep.subr.mxu0 0.0
    %1009 = vmatpush1.msra.mxu0 %v1002
    %1010 = vmatprep.subr.mxu0 0.0
    %1011 = vmatpush1.msra.mxu0 0.0
    %1012 = vmatprep.subr.mxu0 0.0
    %1013 = vmatpush1.msra.mxu0 0.0
    %1014 = vmatprep.subr.mxu0 0.0
    %1015 = vmatpush1.msra.mxu0 0.0
    %1016 = vmatprep.subr.mxu0 0.0
    %1017 = vmatpush1.msra.mxu0 0.0
    %1018 = vmatprep.subr.mxu0 0.0
    %1019 = vmatpush1.msra.mxu0 0.0
    %1020 = vmatprep.subr.mxu0 0.0
    %1021 = vmatpush1.msra.mxu0 0.0
    %1022 = vmatprep.subr.mxu0 0.0
    %1023 = vmatpush1.msra.mxu0 0.0
    %1024 = vmatprep.subr.mxu0 0.0
    %1025 = vmatpush1.msra.mxu0 0.0
    %1026 = vmatprep.subr.mxu0 0.0
    %1027 = vmatpush1.msra.mxu0 0.0
    %1028 = vmatprep.subr.mxu0 0.0
    %1029 = vmatpush1.msra.mxu0 0.0
    %1030 = vmatprep.subr.mxu0 0.0
    %1031 = vmatpush1.msra.mxu0 0.0
    %1032 = vmatprep.subr.mxu0 0.0
    %1033 = vmatpush1.msra.mxu0 0.0
    %1034 = vmatprep.subr.mxu0 0.0
    %1035 = vmatpush1.msra.mxu0 0.0
    %1036 = vmatprep.subr.mxu0 0.0
    %1037 = vmatpush1.msra.mxu0 0.0
    %1038 = vmatprep.subr.mxu0 0.0
    %1039 = vmatpush1.msra.mxu0 0.0
    %1040 = vmatprep.subr.mxu0 0.0
    %1041 = vmatpush1.msra.mxu0 0.0
    %1042 = vmatprep.subr.mxu0 0.0
    %1043 = vmatpush1.msra.mxu0 0.0
    %1044 = vmatprep.subr.mxu0 0.0
    %1045 = vmatpush1.msra.mxu0 0.0
    %1046 = vmatprep.subr.mxu0 0.0
    %1047 = vmatpush1.msra.mxu0 0.0
    %1048 = vmatprep.subr.mxu0 0.0
    %1049 = vmatpush1.msra.mxu0 0.0
    %1050 = vmatprep.subr.mxu0 0.0
    %1051 = vmatpush1.msra.mxu0 0.0
    %1052 = vmatprep.subr.mxu0 0.0
    %1053 = vmatpush1.msra.mxu0 0.0
    %1054 = vmatprep.subr.mxu0 0.0
    %1055 = vmatpush1.msra.mxu0 0.0
    %1056 = vmatprep.subr.mxu0 0.0
    %1057 = vmatpush1.msra.mxu0 0.0
    %1058 = vmatprep.subr.mxu0 0.0
    %1059 = vmatpush1.msra.mxu0 0.0
    %1060 = vmatprep.subr.mxu0 0.0
    %1061 = vmatpush1.msra.mxu0 0.0
    %1062 = vmatprep.subr.mxu0 0.0
    %1063 = vmatpush1.msra.mxu0 0.0
    %1064 = vmatprep.subr.mxu0 0.0
    %1065 = vmatpush1.msra.mxu0 0.0
    %1066 = vmatprep.subr.mxu0 0.0
    %1067 = vmatpush1.msra.mxu0 0.0
    %1068 = vmatprep.subr.mxu0 0.0
    %1069 = vmatpush1.msra.mxu0 0.0
    %1070 = vmatprep.mubr.f32.mxu0 0.0
    %1071 = vmatmul.mubr.f32.gmra.mrb[0].mxu0 %v1004
    %v1072 = vpop.f32.mrb[0].mxu0
    %v1073 = vadd.f32 0.0, %v1072
    %v1074 = vpop.f32.mrb[0].mxu0
    %1075 = vdwg.mxu0
    %v1077 = vsel %vm175, %v829, 0
    %1079 = vmatprep.subr.mxu0 0.0
    %1080 = vmatpush1.msra.mxu0 %v832
    %1081 = vmatprep.subr.mxu0 0.0
    %1082 = vmatpush1.msra.mxu0 %v833
    %1083 = vmatprep.subr.mxu0 0.0
    %1084 = vmatpush1.msra.mxu0 0.0
    %1085 = vmatprep.subr.mxu0 0.0
    %1086 = vmatpush1.msra.mxu0 0.0
    %1087 = vmatprep.subr.mxu0 0.0
    %1088 = vmatpush1.msra.mxu0 0.0
    %1089 = vmatprep.subr.mxu0 0.0
    %1090 = vmatpush1.msra.mxu0 0.0
    %1091 = vmatprep.subr.mxu0 0.0
    %1092 = vmatpush1.msra.mxu0 0.0
    %1093 = vmatprep.subr.mxu0 0.0
    %1094 = vmatpush1.msra.mxu0 0.0
    %1095 = vmatprep.subr.mxu0 0.0
    %1096 = vmatpush1.msra.mxu0 0.0
    %1097 = vmatprep.subr.mxu0 0.0
    %1098 = vmatpush1.msra.mxu0 0.0
    %1099 = vmatprep.subr.mxu0 0.0
    %1100 = vmatpush1.msra.mxu0 0.0
    %1101 = vmatprep.subr.mxu0 0.0
    %1102 = vmatpush1.msra.mxu0 0.0
    %1103 = vmatprep.subr.mxu0 0.0
    %1104 = vmatpush1.msra.mxu0 0.0
    %1105 = vmatprep.subr.mxu0 0.0
    %1106 = vmatpush1.msra.mxu0 0.0
    %1107 = vmatprep.subr.mxu0 0.0
    %1108 = vmatpush1.msra.mxu0 0.0
    %1109 = vmatprep.subr.mxu0 0.0
    %1110 = vmatpush1.msra.mxu0 0.0
    %1111 = vmatprep.subr.mxu0 0.0
    %1112 = vmatpush1.msra.mxu0 0.0
    %1113 = vmatprep.subr.mxu0 0.0
    %1114 = vmatpush1.msra.mxu0 0.0
    %1115 = vmatprep.subr.mxu0 0.0
    %1116 = vmatpush1.msra.mxu0 0.0
    %1117 = vmatprep.subr.mxu0 0.0
    %1118 = vmatpush1.msra.mxu0 0.0
    %1119 = vmatprep.subr.mxu0 0.0
    %1120 = vmatpush1.msra.mxu0 0.0
    %1121 = vmatprep.subr.mxu0 0.0
    %1122 = vmatpush1.msra.mxu0 0.0
    %1123 = vmatprep.subr.mxu0 0.0
    %1124 = vmatpush1.msra.mxu0 0.0
    %1125 = vmatprep.subr.mxu0 0.0
    %1126 = vmatpush1.msra.mxu0 0.0
    %1127 = vmatprep.subr.mxu0 0.0
    %1128 = vmatpush1.msra.mxu0 0.0
    %1129 = vmatprep.subr.mxu0 0.0
    %1130 = vmatpush1.msra.mxu0 0.0
    %1131 = vmatprep.subr.mxu0 0.0
    %1132 = vmatpush1.msra.mxu0 0.0
    %1133 = vmatprep.subr.mxu0 0.0
    %1134 = vmatpush1.msra.mxu0 0.0
    %1135 = vmatprep.subr.mxu0 0.0
    %1136 = vmatpush1.msra.mxu0 0.0
    %1137 = vmatprep.subr.mxu0 0.0
    %1138 = vmatpush1.msra.mxu0 0.0
    %1139 = vmatprep.subr.mxu0 0.0
    %1140 = vmatpush1.msra.mxu0 0.0
    %1141 = vmatprep.subr.mxu0 0.0
    %1142 = vmatpush1.msra.mxu0 0.0
    %1143 = vmatprep.mubr.f32.mxu0 0.0
    %1144 = vmatmul.mubr.f32.gmra.mrb[0].mxu0 %v1077
    %v1145 = vpop.f32.mrb[0].mxu0
    %v1146 = vadd.f32 %v1073, %v1145
    %v1147 = vpop.f32.mrb[0].mxu0
    %1148 = vdwg.mxu0
    %1149 = vst.msk [vmem:[#allocation2 + $0x8] sm:$0xff] %vm69, %v1146
    %s1150 = sld [smem:[#allocation5 + $0x2]]
    %v1151 = vstv %s1150
    %vm1152 = vcmp.ge.s32.totalorder %v161, %v1151
    %v1153 = vsel %vm1152, -1e+30, 0.0
    %vm1154 = vcmp.lt.s32.totalorder %v166, %v1151
    %v1155 = vsel %vm1154, 1, 0
    %v1156 = vcvt.s32.f32 %v1155
    %1157 = vst.msk [vmem:[#allocation3 + $0x10] sm:$0xff] %vm170, %v1156
    %1159 = vrot.lane.b32.xlu0 %v156, 96
    %v1160 = vpop.permute.xlu0 %1159
    %v1161 = vsel %vm175, %v156, 0
    %v1163 = vsel %vm175, %v1160, 0
    %1165 = vmatprep.subr.mxu0 0.0
    %1166 = vmatpush1.xpose.msra.mxu0 %v1163
    %1167 = vmatprep.subr.mxu0 0.0
    %1168 = vmatpush1.xpose.msra.mxu0 0.0
    %1169 = vmatprep.subr.mxu0 0.0
    %1170 = vmatpush1.xpose.msra.mxu0 0.0
    %1171 = vmatprep.subr.mxu0 0.0
    %1172 = vmatpush1.xpose.msra.mxu0 0.0
    %1173 = vmatprep.subr.mxu0 0.0
    %1174 = vmatpush1.xpose.msra.mxu0 0.0
    %1175 = vmatprep.subr.mxu0 0.0
    %1176 = vmatpush1.xpose.msra.mxu0 0.0
    %1177 = vmatprep.subr.mxu0 0.0
    %1178 = vmatpush1.xpose.msra.mxu0 0.0
    %1179 = vmatprep.subr.mxu0 0.0
    %1180 = vmatpush1.xpose.msra.mxu0 0.0
    %1181 = vmatprep.subr.mxu0 0.0
    %1182 = vmatpush1.xpose.msra.mxu0 0.0
    %1183 = vmatprep.subr.mxu0 0.0
    %1184 = vmatpush1.xpose.msra.mxu0 0.0
    %1185 = vmatprep.subr.mxu0 0.0
    %1186 = vmatpush1.xpose.msra.mxu0 0.0
    %1187 = vmatprep.subr.mxu0 0.0
    %1188 = vmatpush1.xpose.msra.mxu0 0.0
    %1189 = vmatprep.subr.mxu0 0.0
    %1190 = vmatpush1.xpose.msra.mxu0 0.0
    %1191 = vmatprep.subr.mxu0 0.0
    %1192 = vmatpush1.xpose.msra.mxu0 0.0
    %1193 = vmatprep.subr.mxu0 0.0
    %1194 = vmatpush1.xpose.msra.mxu0 0.0
    %1195 = vmatprep.subr.mxu0 0.0
    %1196 = vmatpush1.xpose.msra.mxu0 0.0
    %1197 = vmatprep.subr.mxu0 0.0
    %1198 = vmatpush1.xpose.msra.mxu0 0.0
    %1199 = vmatprep.subr.mxu0 0.0
    %1200 = vmatpush1.xpose.msra.mxu0 0.0
    %1201 = vmatprep.subr.mxu0 0.0
    %1202 = vmatpush1.xpose.msra.mxu0 0.0
    %1203 = vmatprep.subr.mxu0 0.0
    %1204 = vmatpush1.xpose.msra.mxu0 0.0
    %1205 = vmatprep.subr.mxu0 0.0
    %1206 = vmatpush1.xpose.msra.mxu0 0.0
    %1207 = vmatprep.subr.mxu0 0.0
    %1208 = vmatpush1.xpose.msra.mxu0 0.0
    %1209 = vmatprep.subr.mxu0 0.0
    %1210 = vmatpush1.xpose.msra.mxu0 0.0
    %1211 = vmatprep.subr.mxu0 0.0
    %1212 = vmatpush1.xpose.msra.mxu0 0.0
    %1213 = vmatprep.subr.mxu0 0.0
    %1214 = vmatpush1.xpose.msra.mxu0 0.0
    %1215 = vmatprep.subr.mxu0 0.0
    %1216 = vmatpush1.xpose.msra.mxu0 0.0
    %1217 = vmatprep.subr.mxu0 0.0
    %1218 = vmatpush1.xpose.msra.mxu0 0.0
    %1219 = vmatprep.subr.mxu0 0.0
    %1220 = vmatpush1.xpose.msra.mxu0 0.0
    %1221 = vmatprep.subr.mxu0 0.0
    %1222 = vmatpush1.xpose.msra.mxu0 0.0
    %1223 = vmatprep.subr.mxu0 0.0
    %1224 = vmatpush1.xpose.msra.mxu0 0.0
    %1225 = vmatprep.subr.mxu0 0.0
    %1226 = vmatpush1.xpose.msra.mxu0 0.0
    %1227 = vmatprep.subr.mxu0 0.0
    %1228 = vmatpush1.xpose.msra.mxu0 0.0
    %1229 = vmatprep.mubr.f32.mxu0 0.0
    %1230 = vmatmul.mubr.f32.gmra.mrb[0].mxu0 %v1161
    %v1231 = vpop.f32.mrb[0].mxu0
    %v1232 = vadd.f32 0.0, %v1231
    %v1233 = vpop.f32.mrb[0].mxu0
    %1234 = vdwg.mxu0
    %v1235 = vmul.f32 %v1232, 0.25
    %v1236 = vadd.f32 %v1235, %v1153
    %v1237 = vsel %vm252, %v1236, -inf
    %1238 = vmax.xlane.f32.xlu0 %v1237
    %v1239 = vpop.xlane.xlu0 %1238
    %v1240 = vsub.f32 %v1236, %v1239
    %v1241 = vmul.f32 %v1240, 1.442695
    %v1242 = vpow.pop %v1241
    %v1243 = vsel %vm252, %v1242, 0.0
    %1244 = vadd.xlane.f32.xlu0 %v1243
    %v1245 = vpop.xlane.xlu0 %1244
    %v1246 = vrcp.pop %v1245
    %v1247 = vmul.f32 %v1242, %v1246
    %1248 = vrot.lane.b32.xlu0 %v156, 64
    %v1249 = vpop.permute.xlu0 %1248
    %v1252 = vsel %vm252, %v1247, 0
    %1254 = vmatprep.subr.mxu0 0.0
    %1255 = vmatpush1.msra.mxu0 %v1249
    %1256 = vmatprep.subr.mxu0 0.0
    %1257 = vmatpush1.msra.mxu0 0.0
    %1258 = vmatprep.subr.mxu0 0.0
    %1259 = vmatpush1.msra.mxu0 0.0
    %1260 = vmatprep.subr.mxu0 0.0
    %1261 = vmatpush1.msra.mxu0 0.0
    %1262 = vmatprep.subr.mxu0 0.0
    %1263 = vmatpush1.msra.mxu0 0.0
    %1264 = vmatprep.subr.mxu0 0.0
    %1265 = vmatpush1.msra.mxu0 0.0
    %1266 = vmatprep.subr.mxu0 0.0
    %1267 = vmatpush1.msra.mxu0 0.0
    %1268 = vmatprep.subr.mxu0 0.0
    %1269 = vmatpush1.msra.mxu0 0.0
    %1270 = vmatprep.subr.mxu0 0.0
    %1271 = vmatpush1.msra.mxu0 0.0
    %1272 = vmatprep.subr.mxu0 0.0
    %1273 = vmatpush1.msra.mxu0 0.0
    %1274 = vmatprep.subr.mxu0 0.0
    %1275 = vmatpush1.msra.mxu0 0.0
    %1276 = vmatprep.subr.mxu0 0.0
    %1277 = vmatpush1.msra.mxu0 0.0
    %1278 = vmatprep.subr.mxu0 0.0
    %1279 = vmatpush1.msra.mxu0 0.0
    %1280 = vmatprep.subr.mxu0 0.0
    %1281 = vmatpush1.msra.mxu0 0.0
    %1282 = vmatprep.subr.mxu0 0.0
    %1283 = vmatpush1.msra.mxu0 0.0
    %1284 = vmatprep.subr.mxu0 0.0
    %1285 = vmatpush1.msra.mxu0 0.0
    %1286 = vmatprep.subr.mxu0 0.0
    %1287 = vmatpush1.msra.mxu0 0.0
    %1288 = vmatprep.subr.mxu0 0.0
    %1289 = vmatpush1.msra.mxu0 0.0
    %1290 = vmatprep.subr.mxu0 0.0
    %1291 = vmatpush1.msra.mxu0 0.0
    %1292 = vmatprep.subr.mxu0 0.0
    %1293 = vmatpush1.msra.mxu0 0.0
    %1294 = vmatprep.subr.mxu0 0.0
    %1295 = vmatpush1.msra.mxu0 0.0
    %1296 = vmatprep.subr.mxu0 0.0
    %1297 = vmatpush1.msra.mxu0 0.0
    %1298 = vmatprep.subr.mxu0 0.0
    %1299 = vmatpush1.msra.mxu0 0.0
    %1300 = vmatprep.subr.mxu0 0.0
    %1301 = vmatpush1.msra.mxu0 0.0
    %1302 = vmatprep.subr.mxu0 0.0
    %1303 = vmatpush1.msra.mxu0 0.0
    %1304 = vmatprep.subr.mxu0 0.0
    %1305 = vmatpush1.msra.mxu0 0.0
    %1306 = vmatprep.subr.mxu0 0.0
    %1307 = vmatpush1.msra.mxu0 0.0
    %1308 = vmatprep.subr.mxu0 0.0
    %1309 = vmatpush1.msra.mxu0 0.0
    %1310 = vmatprep.subr.mxu0 0.0
    %1311 = vmatpush1.msra.mxu0 0.0
    %1312 = vmatprep.subr.mxu0 0.0
    %1313 = vmatpush1.msra.mxu0 0.0
    %1314 = vmatprep.subr.mxu0 0.0
    %1315 = vmatpush1.msra.mxu0 0.0
    %1316 = vmatprep.subr.mxu0 0.0
    %1317 = vmatpush1.msra.mxu0 0.0
    %1318 = vmatprep.mubr.f32.mxu0 0.0
    %1319 = vmatmul.mubr.f32.gmra.mrb[0].mxu0 %v1252
    %v1320 = vpop.f32.mrb[0].mxu0
    %v1321 = vadd.f32 0.0, %v1320
    %v1322 = vpop.f32.mrb[0].mxu0
    %1323 = vdwg.mxu0
    %v1324 = vld [vmem:[%s4] sm:$0xff]
    %v1325 = vld [vmem:[%s4 + $0x8] sm:$0xff]
    %1326 = vrot.lane.b32.xlu0 %v156, 112
    %v1327 = vpop.permute.xlu0 %1326
    %1328 = vrot.lane.b32.xlu0 %v156, 80
    %v1329 = vpop.permute.xlu0 %1328
    %v1330 = vsel %vm175, %v1327, 0
    %v1332 = vsel %vm175, %v1329, 0
    %1334 = vmatprep.subr.mxu0 0.0
    %1335 = vmatpush1.xpose.msra.mxu0 %v1332
    %1336 = vmatprep.subr.mxu0 0.0
    %1337 = vmatpush1.xpose.msra.mxu0 0.0
    %1338 = vmatprep.subr.mxu0 0.0
    %1339 = vmatpush1.xpose.msra.mxu0 0.0
    %1340 = vmatprep.subr.mxu0 0.0
    %1341 = vmatpush1.xpose.msra.mxu0 0.0
    %1342 = vmatprep.subr.mxu0 0.0
    %1343 = vmatpush1.xpose.msra.mxu0 0.0
    %1344 = vmatprep.subr.mxu0 0.0
    %1345 = vmatpush1.xpose.msra.mxu0 0.0
    %1346 = vmatprep.subr.mxu0 0.0
    %1347 = vmatpush1.xpose.msra.mxu0 0.0
    %1348 = vmatprep.subr.mxu0 0.0
    %1349 = vmatpush1.xpose.msra.mxu0 0.0
    %1350 = vmatprep.subr.mxu0 0.0
    %1351 = vmatpush1.xpose.msra.mxu0 0.0
    %1352 = vmatprep.subr.mxu0 0.0
    %1353 = vmatpush1.xpose.msra.mxu0 0.0
    %1354 = vmatprep.subr.mxu0 0.0
    %1355 = vmatpush1.xpose.msra.mxu0 0.0
    %1356 = vmatprep.subr.mxu0 0.0
    %1357 = vmatpush1.xpose.msra.mxu0 0.0
    %1358 = vmatprep.subr.mxu0 0.0
    %1359 = vmatpush1.xpose.msra.mxu0 0.0
    %1360 = vmatprep.subr.mxu0 0.0
    %1361 = vmatpush1.xpose.msra.mxu0 0.0
    %1362 = vmatprep.subr.mxu0 0.0
    %1363 = vmatpush1.xpose.msra.mxu0 0.0
    %1364 = vmatprep.subr.mxu0 0.0
    %1365 = vmatpush1.xpose.msra.mxu0 0.0
    %1366 = vmatprep.subr.mxu0 0.0
    %1367 = vmatpush1.xpose.msra.mxu0 0.0
    %1368 = vmatprep.subr.mxu0 0.0
    %1369 = vmatpush1.xpose.msra.mxu0 0.0
    %1370 = vmatprep.subr.mxu0 0.0
    %1371 = vmatpush1.xpose.msra.mxu0 0.0
    %1372 = vmatprep.subr.mxu0 0.0
    %1373 = vmatpush1.xpose.msra.mxu0 0.0
    %1374 = vmatprep.subr.mxu0 0.0
    %1375 = vmatpush1.xpose.msra.mxu0 0.0
    %1376 = vmatprep.subr.mxu0 0.0
    %1377 = vmatpush1.xpose.msra.mxu0 0.0
    %1378 = vmatprep.subr.mxu0 0.0
    %1379 = vmatpush1.xpose.msra.mxu0 0.0
    %1380 = vmatprep.subr.mxu0 0.0
    %1381 = vmatpush1.xpose.msra.mxu0 0.0
    %1382 = vmatprep.subr.mxu0 0.0
    %1383 = vmatpush1.xpose.msra.mxu0 0.0
    %1384 = vmatprep.subr.mxu0 0.0
    %1385 = vmatpush1.xpose.msra.mxu0 0.0
    %1386 = vmatprep.subr.mxu0 0.0
    %1387 = vmatpush1.xpose.msra.mxu0 0.0
    %1388 = vmatprep.subr.mxu0 0.0
    %1389 = vmatpush1.xpose.msra.mxu0 0.0
    %1390 = vmatprep.subr.mxu0 0.0
    %1391 = vmatpush1.xpose.msra.mxu0 0.0
    %1392 = vmatprep.subr.mxu0 0.0
    %1393 = vmatpush1.xpose.msra.mxu0 0.0
    %1394 = vmatprep.subr.mxu0 0.0
    %1395 = vmatpush1.xpose.msra.mxu0 0.0
    %1396 = vmatprep.subr.mxu0 0.0
    %1397 = vmatpush1.xpose.msra.mxu0 0.0
    %1398 = vmatprep.mubr.f32.mxu0 0.0
    %1399 = vmatmul.mubr.f32.gmra.mrb[0].mxu0 %v1330
    %v1400 = vpop.f32.mrb[0].mxu0
    %v1401 = vadd.f32 0.0, %v1400
    %v1402 = vpop.f32.mrb[0].mxu0
    %1403 = vdwg.mxu0
    %v1404 = vmul.f32 %v1401, 0.25
    %v1405 = vadd.f32 %v1404, %v1153
    %v1406 = vsel %vm252, %v1405, -inf
    %1407 = vmax.xlane.f32.xlu0 %v1406
    %v1408 = vpop.xlane.xlu0 %1407
    %v1409 = vsub.f32 %v1405, %v1408
    %v1410 = vmul.f32 %v1409, 1.442695
    %v1411 = vpow.pop %v1410
    %v1412 = vsel %vm252, %v1411, 0.0
    %1413 = vadd.xlane.f32.xlu0 %v1412
    %v1414 = vpop.xlane.xlu0 %1413
    %v1415 = vrcp.pop %v1414
    %v1416 = vmul.f32 %v1411, %v1415
    %1417 = vrot.lane.b32.xlu0 %v156, 48
    %v1418 = vpop.permute.xlu0 %1417
    %v1421 = vsel %vm252, %v1416, 0
    %1423 = vmatprep.subr.mxu0 0.0
    %1424 = vmatpush1.msra.mxu0 %v1418
    %1425 = vmatprep.subr.mxu0 0.0
    %1426 = vmatpush1.msra.mxu0 0.0
    %1427 = vmatprep.subr.mxu0 0.0
    %1428 = vmatpush1.msra.mxu0 0.0
    %1429 = vmatprep.subr.mxu0 0.0
    %1430 = vmatpush1.msra.mxu0 0.0
    %1431 = vmatprep.subr.mxu0 0.0
    %1432 = vmatpush1.msra.mxu0 0.0
    %1433 = vmatprep.subr.mxu0 0.0
    %1434 = vmatpush1.msra.mxu0 0.0
    %1435 = vmatprep.subr.mxu0 0.0
    %1436 = vmatpush1.msra.mxu0 0.0
    %1437 = vmatprep.subr.mxu0 0.0
    %1438 = vmatpush1.msra.mxu0 0.0
    %1439 = vmatprep.subr.mxu0 0.0
    %1440 = vmatpush1.msra.mxu0 0.0
    %1441 = vmatprep.subr.mxu0 0.0
    %1442 = vmatpush1.msra.mxu0 0.0
    %1443 = vmatprep.subr.mxu0 0.0
    %1444 = vmatpush1.msra.mxu0 0.0
    %1445 = vmatprep.subr.mxu0 0.0
    %1446 = vmatpush1.msra.mxu0 0.0
    %1447 = vmatprep.subr.mxu0 0.0
    %1448 = vmatpush1.msra.mxu0 0.0
    %1449 = vmatprep.subr.mxu0 0.0
    %1450 = vmatpush1.msra.mxu0 0.0
    %1451 = vmatprep.subr.mxu0 0.0
    %1452 = vmatpush1.msra.mxu0 0.0
    %1453 = vmatprep.subr.mxu0 0.0
    %1454 = vmatpush1.msra.mxu0 0.0
    %1455 = vmatprep.subr.mxu0 0.0
    %1456 = vmatpush1.msra.mxu0 0.0
    %1457 = vmatprep.subr.mxu0 0.0
    %1458 = vmatpush1.msra.mxu0 0.0
    %1459 = vmatprep.subr.mxu0 0.0
    %1460 = vmatpush1.msra.mxu0 0.0
    %1461 = vmatprep.subr.mxu0 0.0
    %1462 = vmatpush1.msra.mxu0 0.0
    %1463 = vmatprep.subr.mxu0 0.0
    %1464 = vmatpush1.msra.mxu0 0.0
    %1465 = vmatprep.subr.mxu0 0.0
    %1466 = vmatpush1.msra.mxu0 0.0
    %1467 = vmatprep.subr.mxu0 0.0
    %1468 = vmatpush1.msra.mxu0 0.0
    %1469 = vmatprep.subr.mxu0 0.0
    %1470 = vmatpush1.msra.mxu0 0.0
    %1471 = vmatprep.subr.mxu0 0.0
    %1472 = vmatpush1.msra.mxu0 0.0
    %1473 = vmatprep.subr.mxu0 0.0
    %1474 = vmatpush1.msra.mxu0 0.0
    %1475 = vmatprep.subr.mxu0 0.0
    %1476 = vmatpush1.msra.mxu0 0.0
    %1477 = vmatprep.subr.mxu0 0.0
    %1478 = vmatpush1.msra.mxu0 0.0
    %1479 = vmatprep.subr.mxu0 0.0
    %1480 = vmatpush1.msra.mxu0 0.0
    %1481 = vmatprep.subr.mxu0 0.0
    %1482 = vmatpush1.msra.mxu0 0.0
    %1483 = vmatprep.subr.mxu0 0.0
    %1484 = vmatpush1.msra.mxu0 0.0
    %1485 = vmatprep.subr.mxu0 0.0
    %1486 = vmatpush1.msra.mxu0 0.0
    %1487 = vmatprep.mubr.f32.mxu0 0.0
    %1488 = vmatmul.mubr.f32.gmra.mrb[0].mxu0 %v1421
    %v1489 = vpop.f32.mrb[0].mxu0
    %v1490 = vadd.f32 0.0, %v1489
    %v1491 = vpop.f32.mrb[0].mxu0
    %1492 = vdwg.mxu0
    %v1493 = vld [vmem:[%s4 + $0x10] sm:$0xff]
    %v1494 = vld [vmem:[%s4 + $0x18] sm:$0xff]
    %v1496 = vsel %vm175, %v1490, 0
    %1498 = vmatprep.subr.mxu0 0.0
    %1499 = vmatpush1.msra.mxu0 %v1493
    %1500 = vmatprep.subr.mxu0 0.0
    %1501 = vmatpush1.msra.mxu0 %v1494
    %1502 = vmatprep.subr.mxu0 0.0
    %1503 = vmatpush1.msra.mxu0 0.0
    %1504 = vmatprep.subr.mxu0 0.0
    %1505 = vmatpush1.msra.mxu0 0.0
    %1506 = vmatprep.subr.mxu0 0.0
    %1507 = vmatpush1.msra.mxu0 0.0
    %1508 = vmatprep.subr.mxu0 0.0
    %1509 = vmatpush1.msra.mxu0 0.0
    %1510 = vmatprep.subr.mxu0 0.0
    %1511 = vmatpush1.msra.mxu0 0.0
    %1512 = vmatprep.subr.mxu0 0.0
    %1513 = vmatpush1.msra.mxu0 0.0
    %1514 = vmatprep.subr.mxu0 0.0
    %1515 = vmatpush1.msra.mxu0 0.0
    %1516 = vmatprep.subr.mxu0 0.0
    %1517 = vmatpush1.msra.mxu0 0.0
    %1518 = vmatprep.subr.mxu0 0.0
    %1519 = vmatpush1.msra.mxu0 0.0
    %1520 = vmatprep.subr.mxu0 0.0
    %1521 = vmatpush1.msra.mxu0 0.0
    %1522 = vmatprep.subr.mxu0 0.0
    %1523 = vmatpush1.msra.mxu0 0.0
    %1524 = vmatprep.subr.mxu0 0.0
    %1525 = vmatpush1.msra.mxu0 0.0
    %1526 = vmatprep.subr.mxu0 0.0
    %1527 = vmatpush1.msra.mxu0 0.0
    %1528 = vmatprep.subr.mxu0 0.0
    %1529 = vmatpush1.msra.mxu0 0.0
    %1530 = vmatprep.subr.mxu0 0.0
    %1531 = vmatpush1.msra.mxu0 0.0
    %1532 = vmatprep.subr.mxu0 0.0
    %1533 = vmatpush1.msra.mxu0 0.0
    %1534 = vmatprep.subr.mxu0 0.0
    %1535 = vmatpush1.msra.mxu0 0.0
    %1536 = vmatprep.subr.mxu0 0.0
    %1537 = vmatpush1.msra.mxu0 0.0
    %1538 = vmatprep.subr.mxu0 0.0
    %1539 = vmatpush1.msra.mxu0 0.0
    %1540 = vmatprep.subr.mxu0 0.0
    %1541 = vmatpush1.msra.mxu0 0.0
    %1542 = vmatprep.subr.mxu0 0.0
    %1543 = vmatpush1.msra.mxu0 0.0
    %1544 = vmatprep.subr.mxu0 0.0
    %1545 = vmatpush1.msra.mxu0 0.0
    %1546 = vmatprep.subr.mxu0 0.0
    %1547 = vmatpush1.msra.mxu0 0.0
    %1548 = vmatprep.subr.mxu0 0.0
    %1549 = vmatpush1.msra.mxu0 0.0
    %1550 = vmatprep.subr.mxu0 0.0
    %1551 = vmatpush1.msra.mxu0 0.0
    %1552 = vmatprep.subr.mxu0 0.0
    %1553 = vmatpush1.msra.mxu0 0.0
    %1554 = vmatprep.subr.mxu0 0.0
    %1555 = vmatpush1.msra.mxu0 0.0
    %1556 = vmatprep.subr.mxu0 0.0
    %1557 = vmatpush1.msra.mxu0 0.0
    %1558 = vmatprep.subr.mxu0 0.0
    %1559 = vmatpush1.msra.mxu0 0.0
    %1560 = vmatprep.subr.mxu0 0.0
    %1561 = vmatpush1.msra.mxu0 0.0
    %1562 = vmatprep.mubr.f32.mxu0 0.0
    %1563 = vmatmul.mubr.f32.gmra.mrb[0].mxu0 %v1496
    %v1564 = vpop.f32.mrb[0].mxu0
    %v1565 = vadd.f32 0.0, %v1564
    %v1566 = vpop.f32.mrb[0].mxu0
    %1567 = vdwg.mxu0
    %v1569 = vsel %vm175, %v1321, 0
    %1571 = vmatprep.subr.mxu0 0.0
    %1572 = vmatpush1.msra.mxu0 %v1324
    %1573 = vmatprep.subr.mxu0 0.0
    %1574 = vmatpush1.msra.mxu0 %v1325
    %1575 = vmatprep.subr.mxu0 0.0
    %1576 = vmatpush1.msra.mxu0 0.0
    %1577 = vmatprep.subr.mxu0 0.0
    %1578 = vmatpush1.msra.mxu0 0.0
    %1579 = vmatprep.subr.mxu0 0.0
    %1580 = vmatpush1.msra.mxu0 0.0
    %1581 = vmatprep.subr.mxu0 0.0
    %1582 = vmatpush1.msra.mxu0 0.0
    %1583 = vmatprep.subr.mxu0 0.0
    %1584 = vmatpush1.msra.mxu0 0.0
    %1585 = vmatprep.subr.mxu0 0.0
    %1586 = vmatpush1.msra.mxu0 0.0
    %1587 = vmatprep.subr.mxu0 0.0
    %1588 = vmatpush1.msra.mxu0 0.0
    %1589 = vmatprep.subr.mxu0 0.0
    %1590 = vmatpush1.msra.mxu0 0.0
    %1591 = vmatprep.subr.mxu0 0.0
    %1592 = vmatpush1.msra.mxu0 0.0
    %1593 = vmatprep.subr.mxu0 0.0
    %1594 = vmatpush1.msra.mxu0 0.0
    %1595 = vmatprep.subr.mxu0 0.0
    %1596 = vmatpush1.msra.mxu0 0.0
    %1597 = vmatprep.subr.mxu0 0.0
    %1598 = vmatpush1.msra.mxu0 0.0
    %1599 = vmatprep.subr.mxu0 0.0
    %1600 = vmatpush1.msra.mxu0 0.0
    %1601 = vmatprep.subr.mxu0 0.0
    %1602 = vmatpush1.msra.mxu0 0.0
    %1603 = vmatprep.subr.mxu0 0.0
    %1604 = vmatpush1.msra.mxu0 0.0
    %1605 = vmatprep.subr.mxu0 0.0
    %1606 = vmatpush1.msra.mxu0 0.0
    %1607 = vmatprep.subr.mxu0 0.0
    %1608 = vmatpush1.msra.mxu0 0.0
    %1609 = vmatprep.subr.mxu0 0.0
    %1610 = vmatpush1.msra.mxu0 0.0
    %1611 = vmatprep.subr.mxu0 0.0
    %1612 = vmatpush1.msra.mxu0 0.0
    %1613 = vmatprep.subr.mxu0 0.0
    %1614 = vmatpush1.msra.mxu0 0.0
    %1615 = vmatprep.subr.mxu0 0.0
    %1616 = vmatpush1.msra.mxu0 0.0
    %1617 = vmatprep.subr.mxu0 0.0
    %1618 = vmatpush1.msra.mxu0 0.0
    %1619 = vmatprep.subr.mxu0 0.0
    %1620 = vmatpush1.msra.mxu0 0.0
    %1621 = vmatprep.subr.mxu0 0.0
    %1622 = vmatpush1.msra.mxu0 0.0
    %1623 = vmatprep.subr.mxu0 0.0
    %1624 = vmatpush1.msra.mxu0 0.0
    %1625 = vmatprep.subr.mxu0 0.0
    %1626 = vmatpush1.msra.mxu0 0.0
    %1627 = vmatprep.subr.mxu0 0.0
    %1628 = vmatpush1.msra.mxu0 0.0
    %1629 = vmatprep.subr.mxu0 0.0
    %1630 = vmatpush1.msra.mxu0 0.0
    %1631 = vmatprep.subr.mxu0 0.0
    %1632 = vmatpush1.msra.mxu0 0.0
    %1633 = vmatprep.subr.mxu0 0.0
    %1634 = vmatpush1.msra.mxu0 0.0
    %1635 = vmatprep.mubr.f32.mxu0 0.0
    %1636 = vmatmul.mubr.f32.gmra.mrb[0].mxu0 %v1569
    %v1637 = vpop.f32.mrb[0].mxu0
    %v1638 = vadd.f32 %v1565, %v1637
    %v1639 = vpop.f32.mrb[0].mxu0
    %1640 = vdwg.mxu0
    %1641 = vst.msk [vmem:[#allocation2 + $0x10] sm:$0xff] %vm69, %v1638
    %v1642 = vld [vmem:[#allocation3] sm:$0xff]
    %v1643 = vld [vmem:[#allocation3 + $0x8] sm:$0xff]
    %v1644 = vld [vmem:[#allocation3 + $0x10] sm:$0xff]
    %v1645 = vld [vmem:[#allocation2] sm:$0xff]
    %v1646 = vld [vmem:[#allocation2 + $0x8] sm:$0xff]
    %v1647 = vld [vmem:[#allocation2 + $0x10] sm:$0xff]
    %v1648 = vld [vmem:[%s5] sm:$0x1]
    %v1650 = vlaneseq
    %v1651 = vshrl.u32 %v1650, 7
    %v1652 = vsub.s32 0, %v1651
    %v1653 = vrot.slane %v1648, %v1652
    %v1655 = vadd.f32 %v1645, %v1653
    %v1656 = vadd.f32 %v1646, %v1653
    %v1657 = vadd.f32 %v1647, %v1653
    %v1658 = vadd.f32 %v1655, %v55
    %v1659 = vadd.f32 %v1656, %v56
    %v1660 = vadd.f32 %v1657, %v57
    %v1661 = vsel %vm69, %v1658, 0.0
    %1662 = vadd.xlane.f32.xlu0 %v1661
    %v1663 = vpop.xlane.xlu0 %1662
    %v1664 = vsel %vm69, %v1659, 0.0
    %1665 = vadd.xlane.f32.xlu0 %v1664
    %v1666 = vpop.xlane.xlu0 %1665
    %v1667 = vsel %vm69, %v1660, 0.0
    %1668 = vadd.xlane.f32.xlu0 %v1667
    %v1669 = vpop.xlane.xlu0 %1668
    %v1670 = vrcp.pop 32.0
    %v1671 = vmul.f32 %v1663, %v1670
    %v1672 = vmul.f32 %v1666, %v1670
    %v1673 = vmul.f32 %v1669, %v1670
    %v1674 = vsub.f32 %v1658, %v1671
    %v1675 = vsub.f32 %v1659, %v1672
    %v1676 = vsub.f32 %v1660, %v1673
    %v1677 = vmul.f32 %v1674, %v1674
    %v1678 = vmul.f32 %v1675, %v1675
    %v1679 = vmul.f32 %v1676, %v1676
    %v1680 = vsel %vm69, %v1677, 0.0
    %1681 = vadd.xlane.f32.xlu0 %v1680
    %v1682 = vpop.xlane.xlu0 %1681
    %v1683 = vsel %vm69, %v1678, 0.0
    %1684 = vadd.xlane.f32.xlu0 %v1683
    %v1685 = vpop.xlane.xlu0 %1684
    %v1686 = vsel %vm69, %v1679, 0.0
    %1687 = vadd.xlane.f32.xlu0 %v1686
    %v1688 = vpop.xlane.xlu0 %1687
    %v1689 = vmul.f32 %v1682, %v1670
    %v1690 = vmul.f32 %v1685, %v1670
    %v1691 = vmul.f32 %v1688, %v1670
    %v1692 = vadd.f32 %v1689, 1e-05
    %v1693 = vadd.f32 %v1690, 1e-05
    %v1694 = vadd.f32 %v1691, 1e-05
    %v1695 = vrsqrt.pop %v1692
    %v1696 = vrsqrt.pop %v1693
    %v1697 = vrsqrt.pop %v1694
    %v1698 = vmul.f32 %v1674, %v1695
    %v1699 = vmul.f32 %v1675, %v1696
    %v1700 = vmul.f32 %v1676, %v1697
    %v1701 = vld [vmem:[%s10] sm:$0x1]
    %v1702 = vlaneseq
    %v1703 = vshrl.u32 %v1702, 7
    %v1704 = vsub.s32 0, %v1703
    %v1705 = vrot.slane %v1701, %v1704
    %v1706 = vmul.f32 %v1698, %v1705
    %v1707 = vmul.f32 %v1699, %v1705
    %v1708 = vmul.f32 %v1700, %v1705
    %v1709 = vld [vmem:[%s10 + $0x1] sm:$0x1]
    %v1710 = vlaneseq
    %v1711 = vshrl.u32 %v1710, 7
    %v1712 = vsub.s32 0, %v1711
    %v1713 = vrot.slane %v1709, %v1712
    %v1714 = vadd.f32 %v1706, %v1713
    %v1715 = vadd.f32 %v1707, %v1713
    %v1716 = vadd.f32 %v1708, %v1713
    %1718 = vset.pattern.permute.xlu0 0
    %1719 = vperm.xlu0 %1718, %v1642
    %v1720 = vpop.permute.xlu0 %1719
    %1723 = vset.pattern.permute.xlu0 0
    %1724 = vperm.xlu0 %1723, %v1643
    %v1725 = vpop.permute.xlu0 %1724
    %1728 = vset.pattern.permute.xlu0 0
    %1729 = vperm.xlu0 %1728, %v1644
    %v1730 = vpop.permute.xlu0 %1729
    %v1732 = vmul.f32 %v1714, %v1720
    %v1733 = vmul.f32 %v1715, %v1725
    %v1734 = vmul.f32 %v1716, %v1730
    %v1735 = vld [vmem:[%s6] sm:$0xff]
    %v1736 = vld [vmem:[%s6 + $0x8] sm:$0xff]
    %v1737 = vld [vmem:[%s6 + $0x10] sm:$0xff]
    %v1738 = vld [vmem:[%s6 + $0x18] sm:$0xff]
    %v1739 = vld [vmem:[%s7] sm:$0x1]
    %v1741 = vlaneseq
    %v1742 = vshrl.u32 %v1741, 7
    %v1743 = vsub.s32 0, %v1742
    %v1744 = vrot.slane %v1739, %v1743
    %v1747 = vsel %vm69, %v1732, 0
    %v1750 = vsel %vm69, %v1733, 0
    %v1753 = vsel %vm69, %v1734, 0
    %1755 = vmatprep.subr.mxu0 0.0
    %1756 = vmatpush1.msra.mxu0 %v1735
    %1757 = vmatprep.subr.mxu0 0.0
    %1758 = vmatpush1.msra.mxu0 %v1736
    %1759 = vmatprep.subr.mxu0 0.0
    %1760 = vmatpush1.msra.mxu0 %v1737
    %1761 = vmatprep.subr.mxu0 0.0
    %1762 = vmatpush1.msra.mxu0 %v1738
    %1763 = vmatprep.subr.mxu0 0.0
    %1764 = vmatpush1.msra.mxu0 0.0
    %1765 = vmatprep.subr.mxu0 0.0
    %1766 = vmatpush1.msra.mxu0 0.0
    %1767 = vmatprep.subr.mxu0 0.0
    %1768 = vmatpush1.msra.mxu0 0.0
    %1769 = vmatprep.subr.mxu0 0.0
    %1770 = vmatpush1.msra.mxu0 0.0
    %1771 = vmatprep.subr.mxu0 0.0
    %1772 = vmatpush1.msra.mxu0 0.0
    %1773 = vmatprep.subr.mxu0 0.0
    %1774 = vmatpush1.msra.mxu0 0.0
    %1775 = vmatprep.subr.mxu0 0.0
    %1776 = vmatpush1.msra.mxu0 0.0
    %1777 = vmatprep.subr.mxu0 0.0
    %1778 = vmatpush1.msra.mxu0 0.0
    %1779 = vmatprep.subr.mxu0 0.0
    %1780 = vmatpush1.msra.mxu0 0.0
    %1781 = vmatprep.subr.mxu0 0.0
    %1782 = vmatpush1.msra.mxu0 0.0
    %1783 = vmatprep.subr.mxu0 0.0
    %1784 = vmatpush1.msra.mxu0 0.0
    %1785 = vmatprep.subr.mxu0 0.0
    %1786 = vmatpush1.msra.mxu0 0.0
    %1787 = vmatprep.subr.mxu0 0.0
    %1788 = vmatpush1.msra.mxu0 0.0
    %1789 = vmatprep.subr.mxu0 0.0
    %1790 = vmatpush1.msra.mxu0 0.0
    %1791 = vmatprep.subr.mxu0 0.0
    %1792 = vmatpush1.msra.mxu0 0.0
    %1793 = vmatprep.subr.mxu0 0.0
    %1794 = vmatpush1.msra.mxu0 0.0
    %1795 = vmatprep.subr.mxu0 0.0
    %1796 = vmatpush1.msra.mxu0 0.0
    %1797 = vmatprep.subr.mxu0 0.0
    %1798 = vmatpush1.msra.mxu0 0.0
    %1799 = vmatprep.subr.mxu0 0.0
    %1800 = vmatpush1.msra.mxu0 0.0
    %1801 = vmatprep.subr.mxu0 0.0
    %1802 = vmatpush1.msra.mxu0 0.0
    %1803 = vmatprep.subr.mxu0 0.0
    %1804 = vmatpush1.msra.mxu0 0.0
    %1805 = vmatprep.subr.mxu0 0.0
    %1806 = vmatpush1.msra.mxu0 0.0
    %1807 = vmatprep.subr.mxu0 0.0
    %1808 = vmatpush1.msra.mxu0 0.0
    %1809 = vmatprep.subr.mxu0 0.0
    %1810 = vmatpush1.msra.mxu0 0.0
    %1811 = vmatprep.subr.mxu0 0.0
    %1812 = vmatpush1.msra.mxu0 0.0
    %1813 = vmatprep.subr.mxu0 0.0
    %1814 = vmatpush1.msra.mxu0 0.0
    %1815 = vmatprep.subr.mxu0 0.0
    %1816 = vmatpush1.msra.mxu0 0.0
    %1817 = vmatprep.subr.mxu0 0.0
    %1818 = vmatpush1.msra.mxu0 0.0
    %1819 = vmatprep.mubr.f32.mxu0 0.0
    %1820 = vmatmul.mubr.f32.gmra.mrb[0].mxu0 %v1747
    %v1821 = vpop.f32.mrb[0].mxu0
    %v1822 = vadd.f32 %v1744, %v1821
    %v1823 = vpop.f32.mrb[0].mxu0
    %1824 = vmatprep.mubr.f32.mxu0 0.0
    %1825 = vmatmul.mubr.f32.gmra.mrb[0].mxu0 %v1750
    %v1826 = vpop.f32.mrb[0].mxu0
    %v1827 = vadd.f32 %v1744, %v1826
    %v1828 = vpop.f32.mrb[0].mxu0
    %1829 = vmatprep.mubr.f32.mxu0 0.0
    %1830 = vmatmul.mubr.f32.gmra.mrb[0].mxu0 %v1753
    %v1831 = vpop.f32.mrb[0].mxu0
    %v1832 = vadd.f32 %v1744, %v1831
    %v1833 = vpop.f32.mrb[0].mxu0
    %1834 = vdwg.mxu0
    %v1835 = vmax.f32 %v1822, 0.0
    %v1836 = vmax.f32 %v1827, 0.0
    %v1837 = vmax.f32 %v1832, 0.0
    %v1838 = vld [vmem:[%s8] sm:$0xff]
    %v1839 = vld [vmem:[%s8 + $0x8] sm:$0xff]
    %v1840 = vld [vmem:[%s8 + $0x10] sm:$0xff]
    %v1841 = vld [vmem:[%s8 + $0x18] sm:$0xff]
    %v1842 = vld [vmem:[%s8 + $0x20] sm:$0xff]
    %v1843 = vld [vmem:[%s8 + $0x28] sm:$0xff]
    %v1844 = vld [vmem:[%s8 + $0x30] sm:$0xff]
    %v1845 = vld [vmem:[%s8 + $0x38] sm:$0xff]
    %v1846 = vld [vmem:[%s9] sm:$0x1]
    %v1848 = vlaneseq
    %v1849 = vshrl.u32 %v1848, 7
    %v1850 = vsub.s32 0, %v1849
    %v1851 = vrot.slane %v1846, %v1850
    %vm1853 = vcmask 523264
    %v1855 = vsel %vm1853, %v1835, 0
    %v1858 = vsel %vm1853, %v1836, 0
    %v1861 = vsel %vm1853, %v1837, 0
    %1863 = vmatprep.subr.mxu0 0.0
    %1864 = vmatpush1.msra.mxu0 %v1838
    %1865 = vmatprep.subr.mxu0 0.0
    %1866 = vmatpush1.msra.mxu0 %v1839
    %1867 = vmatprep.subr.mxu0 0.0
    %1868 = vmatpush1.msra.mxu0 %v1840
    %1869 = vmatprep.subr.mxu0 0.0
    %1870 = vmatpush1.msra.mxu0 %v1841
    %1871 = vmatprep.subr.mxu0 0.0
    %1872 = vmatpush1.msra.mxu0 %v1842
    %1873 = vmatprep.subr.mxu0 0.0
    %1874 = vmatpush1.msra.mxu0 %v1843
    %1875 = vmatprep.subr.mxu0 0.0
    %1876 = vmatpush1.msra.mxu0 %v1844
    %1877 = vmatprep.subr.mxu0 0.0
    %1878 = vmatpush1.msra.mxu0 %v1845
    %1879 = vmatprep.subr.mxu0 0.0
    %1880 = vmatpush1.msra.mxu0 0.0
    %1881 = vmatprep.subr.mxu0 0.0
    %1882 = vmatpush1.msra.mxu0 0.0
    %1883 = vmatprep.subr.mxu0 0.0
    %1884 = vmatpush1.msra.mxu0 0.0
    %1885 = vmatprep.subr.mxu0 0.0
    %1886 = vmatpush1.msra.mxu0 0.0
    %1887 = vmatprep.subr.mxu0 0.0
    %1888 = vmatpush1.msra.mxu0 0.0
    %1889 = vmatprep.subr.mxu0 0.0
    %1890 = vmatpush1.msra.mxu0 0.0
    %1891 = vmatprep.subr.mxu0 0.0
    %1892 = vmatpush1.msra.mxu0 0.0
    %1893 = vmatprep.subr.mxu0 0.0
    %1894 = vmatpush1.msra.mxu0 0.0
    %1895 = vmatprep.subr.mxu0 0.0
    %1896 = vmatpush1.msra.mxu0 0.0
    %1897 = vmatprep.subr.mxu0 0.0
    %1898 = vmatpush1.msra.mxu0 0.0
    %1899 = vmatprep.subr.mxu0 0.0
    %1900 = vmatpush1.msra.mxu0 0.0
    %1901 = vmatprep.subr.mxu0 0.0
    %1902 = vmatpush1.msra.mxu0 0.0
    %1903 = vmatprep.subr.mxu0 0.0
    %1904 = vmatpush1.msra.mxu0 0.0
    %1905 = vmatprep.subr.mxu0 0.0
    %1906 = vmatpush1.msra.mxu0 0.0
    %1907 = vmatprep.subr.mxu0 0.0
    %1908 = vmatpush1.msra.mxu0 0.0
    %1909 = vmatprep.subr.mxu0 0.0
    %1910 = vmatpush1.msra.mxu0 0.0
    %1911 = vmatprep.subr.mxu0 0.0
    %1912 = vmatpush1.msra.mxu0 0.0
    %1913 = vmatprep.subr.mxu0 0.0
    %1914 = vmatpush1.msra.mxu0 0.0
    %1915 = vmatprep.subr.mxu0 0.0
    %1916 = vmatpush1.msra.mxu0 0.0
    %1917 = vmatprep.subr.mxu0 0.0
    %1918 = vmatpush1.msra.mxu0 0.0
    %1919 = vmatprep.subr.mxu0 0.0
    %1920 = vmatpush1.msra.mxu0 0.0
    %1921 = vmatprep.subr.mxu0 0.0
    %1922 = vmatpush1.msra.mxu0 0.0
    %1923 = vmatprep.subr.mxu0 0.0
    %1924 = vmatpush1.msra.mxu0 0.0
    %1925 = vmatprep.subr.mxu0 0.0
    %1926 = vmatpush1.msra.mxu0 0.0
    %1927 = vmatprep.mubr.f32.mxu0 0.0
    %1928 = vmatmul.mubr.f32.gmra.mrb[0].mxu0 %v1855
    %v1929 = vpop.f32.mrb[0].mxu0
    %v1930 = vadd.f32 %v1851, %v1929
    %v1931 = vpop.f32.mrb[0].mxu0
    %1932 = vmatprep.mubr.f32.mxu0 0.0
    %1933 = vmatmul.mubr.f32.gmra.mrb[0].mxu0 %v1858
    %v1934 = vpop.f32.mrb[0].mxu0
    %v1935 = vadd.f32 %v1851, %v1934
    %v1936 = vpop.f32.mrb[0].mxu0
    %1937 = vmatprep.mubr.f32.mxu0 0.0
    %1938 = vmatmul.mubr.f32.gmra.mrb[0].mxu0 %v1861
    %v1939 = vpop.f32.mrb[0].mxu0
    %v1940 = vadd.f32 %v1851, %v1939
    %v1941 = vpop.f32.mrb[0].mxu0
    %1942 = vdwg.mxu0
    %v1943 = vadd.f32 %v1930, %v1732
    %v1944 = vadd.f32 %v1935, %v1733
    %v1945 = vadd.f32 %v1940, %v1734
    %v1946 = vsel %vm69, %v1943, 0.0
    %1947 = vadd.xlane.f32.xlu0 %v1946
    %v1948 = vpop.xlane.xlu0 %1947
    %v1949 = vsel %vm69, %v1944, 0.0
    %1950 = vadd.xlane.f32.xlu0 %v1949
    %v1951 = vpop.xlane.xlu0 %1950
    %v1952 = vsel %vm69, %v1945, 0.0
    %1953 = vadd.xlane.f32.xlu0 %v1952
    %v1954 = vpop.xlane.xlu0 %1953
    %v1955 = vmul.f32 %v1948, %v1670
    %v1956 = vmul.f32 %v1951, %v1670
    %v1957 = vmul.f32 %v1954, %v1670
    %v1958 = vsub.f32 %v1943, %v1955
    %v1959 = vsub.f32 %v1944, %v1956
    %v1960 = vsub.f32 %v1945, %v1957
    %v1961 = vmul.f32 %v1958, %v1958
    %v1962 = vmul.f32 %v1959, %v1959
    %v1963 = vmul.f32 %v1960, %v1960
    %v1964 = vsel %vm69, %v1961, 0.0
    %1965 = vadd.xlane.f32.xlu0 %v1964
    %v1966 = vpop.xlane.xlu0 %1965
    %v1967 = vsel %vm69, %v1962, 0.0
    %1968 = vadd.xlane.f32.xlu0 %v1967
    %v1969 = vpop.xlane.xlu0 %1968
    %v1970 = vsel %vm69, %v1963, 0.0
    %1971 = vadd.xlane.f32.xlu0 %v1970
    %v1972 = vpop.xlane.xlu0 %1971
    %v1973 = vmul.f32 %v1966, %v1670
    %v1974 = vmul.f32 %v1969, %v1670
    %v1975 = vmul.f32 %v1972, %v1670
    %v1976 = vadd.f32 %v1973, 1e-05
    %v1977 = vadd.f32 %v1974, 1e-05
    %v1978 = vadd.f32 %v1975, 1e-05
    %v1979 = vrsqrt.pop %v1976
    %v1980 = vrsqrt.pop %v1977
    %v1981 = vrsqrt.pop %v1978
    %v1982 = vmul.f32 %v1958, %v1979
    %v1983 = vmul.f32 %v1959, %v1980
    %v1984 = vmul.f32 %v1960, %v1981
    %v1985 = vld [vmem:[%s10 + $0x2] sm:$0x1]
    %v1986 = vlaneseq
    %v1987 = vshrl.u32 %v1986, 7
    %v1988 = vsub.s32 0, %v1987
    %v1989 = vrot.slane %v1985, %v1988
    %v1990 = vmul.f32 %v1982, %v1989
    %v1991 = vmul.f32 %v1983, %v1989
    %v1992 = vmul.f32 %v1984, %v1989
    %v1993 = vld [vmem:[%s10 + $0x3] sm:$0x1]
    %v1994 = vlaneseq
    %v1995 = vshrl.u32 %v1994, 7
    %v1996 = vsub.s32 0, %v1995
    %v1997 = vrot.slane %v1993, %v1996
    %v1998 = vadd.f32 %v1990, %v1997
    %v1999 = vadd.f32 %v1991, %v1997
    %v2000 = vadd.f32 %v1992, %v1997
    %v2001 = vmul.f32 %v1998, %v1720
    %v2002 = vmul.f32 %v1999, %v1725
    %v2003 = vmul.f32 %v2000, %v1730
    %2004 = vst.msk [vmem:[#allocation9] sm:$0xff] %vm69, %v2001
    %2005 = vst.msk [vmem:[#allocation9 + $0x8] sm:$0xff] %vm69, %v2002
    %2006 = vst.msk [vmem:[#allocation9 + $0x10] sm:$0xff] %vm69, %v2003
    // Predicated region
    $region46: #{tpu_custom_call.1} parent=1 // pred_check
      _
    $region47: #{tpu_custom_call.1} parent=1 // pred_check_branch
      %2008 = sbr.rel (0) target = $region49
    $region48: #{tpu_custom_call.1} parent=1 // pred_region
      %s2010 = ssub.s32 384, 384
      %2011 = vsyncadd [#allocation8], %s2010
      %s2012 = sshll.u32 [#allocation9], 4
      %s2013 = int_to_ptr.vmem [resolvable:$true] %s2012
      %2018 = dma.vmem_to_hbm [thread:$0]  %s2013, 384, %s11, [#allocation8], 128, 128, 8
    $region49: #{tpu_custom_call.1} parent=1 // pred_fallthru
      _
    // Predicated region
    $region50: #{tpu_custom_call.1} parent=1 // pred_check
      _
    $region51: #{tpu_custom_call.1} parent=1 // pred_check_branch
      %2020 = sbr.rel (0) target = $region53
    $region52: #{tpu_custom_call.1} parent=1 // pred_region
      %2021 = dma.done [#allocation8], 384
    $region53: #{tpu_custom_call.1} parent=1 // pred_fallthru
      _
    %2022 = vsyncpa [#allocation7], 1
    %2023 = vsyncpa [#allocation8], 1

</llo_original>
